<compile_context>
chip_gen: v6e
topology: v6e:2x2x1
jax: 0.10.0
libtpu: 0.0.40
codegen_flags: <defaults>
</compile_context>

<pallas_src>
import functools

import jax
import jax.numpy as jnp
from jax.experimental import pallas as pl
from jax.experimental.pallas import tpu as pltpu


# ---------------------------------------------------------------------------
# Static polyphase plan (all Python ints, computed once in the wrapper)
# ---------------------------------------------------------------------------
def _build_plan(L, kernel_size, stride, n_conv):
    K, s = kernel_size, stride
    pad = K // 2
    layers = []
    Lin = L
    for l in range(n_conv):
        P = s ** (n_conv - l)          # phases the layer's padded input is stored in
        Q = s ** (n_conv - 1 - l)      # phases the layer's output must be produced in
        Lp = Lin + 2 * pad
        T = -(-Lp // P)                # per-phase buffer length (ceil)
        Lo = (Lp - K) // s + 1
        assert Lo % Q == 0, "output length must divide the phase count"
        M = Lo // Q
        # tap (phase, lane-offset) for output phase a, tap k: input position s*a + k
        taps = tuple(tuple(((s * a + k) % P, (s * a + k) // P) for k in range(K))
                     for a in range(Q))
        # where output phase a lands in the NEXT layer's phase scratch (period Q)
        writes = (tuple(((a + pad) % Q, (a + pad) // Q) for a in range(Q))
                  if l < n_conv - 1 else None)
        # halo columns of THIS layer's input phase buffers that must be zero
        halo = tuple((p % P, p // P)
                     for p in list(range(pad)) + list(range(pad + Lin, P * T)))
        layers.append(dict(P=P, Q=Q, T=T, Lin=Lin, Lo=Lo, M=M,
                           taps=taps, writes=writes, halo=halo))
        Lin = Lo
    return layers


# ---------------------------------------------------------------------------
# Fused kernel: conv stack + LeakyReLU + final 1x1 conv + mean score (per batch row)
# ---------------------------------------------------------------------------
def _fused_discriminator_kernel(*refs, n_conv, slope, plan, inv_denom):
    # ---- unpack refs -------------------------------------------------------
    x_ref = refs[0]                                     # (1, P0, C0, T0) input phases
    w_refs = [refs[1 + 2 * i] for i in range(n_conv)]   # (Cout, K*Cin) f32
    b_refs = [refs[2 + 2 * i] for i in range(n_conv)]   # (Cout, 1)     f32
    wl_ref = refs[1 + 2 * n_conv]                       # (C_last, out_size) f32
    bl_ref = refs[2 + 2 * n_conv]                       # (out_size, 1) f32
    n_in = 3 + 2 * n_conv
    feat_refs = list(refs[n_in:n_in + n_conv])          # (1, Q_l, Cout_l, M_l) per layer
    featl_ref = refs[n_in + n_conv]                     # (1, out_size, L_last)
    score_ref = refs[n_in + n_conv + 1]                 # (1, 1, 1)
    xp_refs = list(refs[n_in + n_conv + 2:])            # phase scratch, layers 1..n-1

    # ---- zero only the halo columns of the phase scratch (interiors are fully
    #      overwritten below; this is a handful of (C,1) stores per step) -----
    for l in range(1, n_conv):
        xp = xp_refs[l - 1]
        zcol = jnp.zeros((xp.shape[1], 1), jnp.float32)
        for (r, t) in plan[l]["halo"]:
            xp[r, :, t:t + 1] = zcol

    # ---- strided conv layers: matmul -> feature store -> LeakyReLU -> next scratch
    # NOTE(v6e): layer 0/1 (K*Cin = 20/40) could alternatively run as VPU broadcast-FMA;
    # at these sizes the MXU dot is not the bottleneck, so keep the simpler matmul path.
    act_last = None
    for l in range(n_conv):
        lp = plan[l]
        Q, M = lp["Q"], lp["M"]
        w2 = w_refs[l][...]                             # (Cout, K*Cin)
        bias = b_refs[l][...]                           # (Cout, 1)

        def read_tap(r, t0, _l=l, _M=M):
            if _l == 0:
                return x_ref[0, r, :, t0:t0 + _M]       # (Cin, M) contiguous slice
            return xp_refs[_l - 1][r, :, t0:t0 + _M]

        for a in range(Q):
            # im2col slab with contraction K*Cin, built from contiguous phase slices
            slab = jnp.concatenate([read_tap(r, t0) for (r, t0) in lp["taps"][a]],
                                   axis=0)              # (K*Cin, M)
            y = jnp.dot(w2, slab, preferred_element_type=jnp.float32) + bias
            feat_refs[l][0, a, :, :] = y                # pre-activation feature
            act = jnp.maximum(y, slope * y)             # LeakyReLU(slope)
            if l < n_conv - 1:
                r_w, t_w = lp["writes"][a]
                xp_refs[l][r_w, :, t_w:t_w + M] = act   # fused staging into next layer
            else:
                act_last = act                          # last conv layer has Q == 1

    # ---- final 1x1 conv ----------------------------------------------------
    out_size = bl_ref.shape[0]
    if out_size == 1:
        # Cout=1: VPU broadcast-multiply + sublane reduction (no degenerate MXU op)
        y_last = jnp.sum(wl_ref[...] * act_last, axis=0, keepdims=True) + bl_ref[...]
    else:
        y_last = jax.lax.dot_general(wl_ref[...], act_last,
                                     (((0,), (0,)), ((), ())),
                                     preferred_element_type=jnp.float32) + bl_ref[...]
    featl_ref[0, :, :] = y_last                         # (out_size, L_last), lane-dense

    # ---- score: mean over all non-batch elements ----------------------------
    s = jnp.sum(y_last, axis=1, keepdims=True)          # (out_size, 1)
    s = jnp.sum(s, axis=0, keepdims=True)               # (1, 1)
    score_ref[...] = jnp.reshape(s * inv_denom, (1, 1, 1))


# ---------------------------------------------------------------------------
# Wrapper
# ---------------------------------------------------------------------------
def shared_discriminator_forward(x_ncl, params, kernel_size, stride, slope):
    """Mirrors SharedDiscriminatorConvNet.forward (Conv1d flavour).

    x_ncl  : (B, C_in, L) float32, PyTorch NCL layout.
    params : [(w, b), ...] with torch Conv1d weight layout (C_out, C_in, K); last entry
             is the 1x1 output conv.
    Returns (score (B,), features list of (B, C_l, L_l) pre-activation conv outputs).
    """
    B, C0, L = x_ncl.shape
    n_conv = len(params) - 1
    K, s = kernel_size, stride
    pad = K // 2
    assert K % 2 == 1 and isinstance(s, int)
    # TODO(synk): handle L not divisible by stride**n_layers (ragged tail positions).
    assert L % (s ** n_conv) == 0, "L must be a multiple of stride**n_layers"

    plan = _build_plan(L, K, s, n_conv)
    chans = [C0] + [w.shape[0] for (w, _) in params[:-1]]
    w_last, b_last = params[-1]
    out_size = w_last.shape[0]
    L_last = plan[-1]["Lo"]
    inv_denom = 1.0 / float(out_size * L_last)

    # --- inputs: raw input zero-padded (conv halo + tail) and phase-split ONCE ----
    P0, T0 = plan[0]["P"], plan[0]["T"]
    x_pad = jnp.pad(x_ncl.astype(jnp.float32),
                    ((0, 0), (0, 0), (pad, P0 * T0 - L - pad)))
    x_ph = jnp.transpose(x_pad.reshape(B, C0, T0, P0), (0, 3, 1, 2))   # (B, P0, C0, T0)

    ops = [x_ph]
    in_specs = [pl.BlockSpec((1, P0, C0, T0), lambda b: (b, 0, 0, 0))]
    for (w, bb) in params[:-1]:
        cout, cin, _ = w.shape
        # (Cout, Cin, K) -> (Cout, K*Cin) matching slab row order k*Cin + ci
        w2 = jnp.transpose(w, (0, 2, 1)).reshape(cout, K * cin).astype(jnp.float32)
        ops += [w2, bb.astype(jnp.float32).reshape(cout, 1)]
        in_specs += [pl.BlockSpec(w2.shape, lambda b: (0, 0)),
                     pl.BlockSpec((cout, 1), lambda b: (0, 0))]
    wl = jnp.transpose(w_last[:, :, 0], (1, 0)).astype(jnp.float32)    # (C_last, out)
    bl = b_last.astype(jnp.float32).reshape(out_size, 1)
    ops += [wl, bl]
    in_specs += [pl.BlockSpec(wl.shape, lambda b: (0, 0)),
                 pl.BlockSpec((out_size, 1), lambda b: (0, 0))]

    # --- outputs: phase-split features per strided conv, plain final feature, score ---
    out_shape, out_specs = [], []
    for l, (w, _) in enumerate(params[:-1]):
        cout = w.shape[0]
        Q, M = plan[l]["Q"], plan[l]["M"]
        out_shape.append(jax.ShapeDtypeStruct((B, Q, cout, M), jnp.float32))
        out_specs.append(pl.BlockSpec((1, Q, cout, M), lambda b: (b, 0, 0, 0)))
    out_shape.append(jax.ShapeDtypeStruct((B, out_size, L_last), jnp.float32))
    out_specs.append(pl.BlockSpec((1, out_size, L_last), lambda b: (b, 0, 0)))
    out_shape.append(jax.ShapeDtypeStruct((B, 1, 1), jnp.float32))
    out_specs.append(pl.BlockSpec((1, 1, 1), lambda b: (b, 0, 0)))

    # --- phase scratch for layers 1..n-1 (layer 0's input arrives pre-phased) ----
    scratch_shapes = [pltpu.VMEM((plan[l]["P"], chans[l], plan[l]["T"]), jnp.float32)
                      for l in range(1, n_conv)]

    kernel = functools.partial(_fused_discriminator_kernel, n_conv=n_conv,
                               slope=slope, plan=plan, inv_denom=inv_denom)

    outs = pl.pallas_call(
        kernel,
        grid=(B,),                                      # batch axis; no Python batch loop
        in_specs=in_specs,
        out_specs=tuple(out_specs),
        out_shape=tuple(out_shape),
        scratch_shapes=scratch_shapes,
        compiler_params=pltpu.CompilerParams(
            dimension_semantics=("parallel",),          # v7x: shard batch over 2 TCs
            vmem_limit_bytes=32 * 1024 * 1024),         # explicit (v5e default is 16 MiB)
    )(*ops)

    # --- wrapper-side layout plumbing: re-interleave phase-split features (NCL) ---
    features = []
    for l in range(n_conv):
        f = outs[l]                                     # (B, Q, Cout, M)
        _, Q, C, M = f.shape
        features.append(jnp.transpose(f, (0, 2, 3, 1)).reshape(B, C, M * Q))
    features.append(outs[n_conv])                       # final 1x1 feature, already NCL
    score = outs[n_conv + 1].reshape(B)
    return score, features


# ---------------------------------------------------------------------------
# Parameter init (deterministic, synthetic) + pure-JAX reference for checking
# ---------------------------------------------------------------------------
def init_params(key, in_size, out_size, capacity, n_layers, kernel_size):
    channels = [in_size] + [capacity * 2 ** i for i in range(n_layers)]
    params = []
    for i in range(n_layers):
        key, k1, k2 = jax.random.split(key, 3)
        fan_in = channels[i] * kernel_size
        w = jax.random.normal(k1, (channels[i + 1], channels[i], kernel_size),
                              jnp.float32) / jnp.sqrt(fan_in)
        b = 0.01 * jax.random.normal(k2, (channels[i + 1],), jnp.float32)
        params.append((w, b))
    key, k1, k2 = jax.random.split(key, 3)
    w = jax.random.normal(k1, (out_size, channels[-1], 1), jnp.float32) / jnp.sqrt(channels[-1])
    b = 0.01 * jax.random.normal(k2, (out_size,), jnp.float32)
    params.append((w, b))
    return params


def ref_forward(x_ncl, params, strides, pads, slope):
    x = x_ncl
    features = []
    n = len(params)
    for i, (w, b) in enumerate(params):
        y = jax.lax.conv_general_dilated(
            x, w, window_strides=(strides[i],), padding=[(pads[i], pads[i])],
            dimension_numbers=("NCH", "OIH", "NCH"))
        y = y + b[None, :, None]
        features.append(y)
        x = y if i == n - 1 else jnp.where(y >= 0, y, slope * y)
    score = x.reshape(x.shape[0], -1).mean(-1)
    return score, features


# ---------------------------------------------------------------------------
if __name__ == "__main__":
    # Module hyperparameters
    in_size, out_size = 4, 1
    capacity, n_layers = 8, 3
    kernel_size, stride = 5, 2
    slope = 0.2                                   # LeakyReLU negative slope
    pad = kernel_size // 2

    key = jax.random.PRNGKey(0)
    key, xkey = jax.random.split(key)
    B, L = 2, 64
    x = jax.random.normal(xkey, (B, in_size, L), jnp.float32)   # (B, C, L) NCL

    params = init_params(key, in_size, out_size, capacity, n_layers, kernel_size)

    score, features = shared_discriminator_forward(x, params, kernel_size, stride, slope)
    score = jax.block_until_ready(score)
    features = [jax.block_until_ready(f) for f in features]

    # Pure-JAX f32 reference (lax.conv).  The Pallas kernel keeps f32 operands with f32
    # accumulation; tolerance covers MXU f32-pass behaviour.
    strides = [stride] * n_layers + [1]           # final 1x1 conv: stride 1
    pads = [pad] * n_layers + [0]                 # final 1x1 conv: no padding
    ref_score, ref_feats = ref_forward(x, params, strides, pads, slope)

    assert score.shape == ref_score.shape, (score.shape, ref_score.shape)
    assert jnp.allclose(score, ref_score, atol=1e-2, rtol=1e-2), (score, ref_score)
    for f, rf in zip(features, ref_feats):
        assert f.shape == rf.shape, (f.shape, rf.shape)
        assert jnp.allclose(f, rf, atol=1e-2, rtol=1e-2)

    print("KERNEL_OK")
</pallas_src>

<mosaic_0001>
module attributes {stable_mosaic.version = 11 : i64} {
  func.func @_fused_discriminator_kernel(%arg0: i32, %arg1: memref<1x8x4x9xf32, #tpu.memory_space<vmem>>, %arg2: memref<8x20xf32, #tpu.memory_space<vmem>>, %arg3: memref<8x1xf32, #tpu.memory_space<vmem>>, %arg4: memref<16x40xf32, #tpu.memory_space<vmem>>, %arg5: memref<16x1xf32, #tpu.memory_space<vmem>>, %arg6: memref<32x80xf32, #tpu.memory_space<vmem>>, %arg7: memref<32x1xf32, #tpu.memory_space<vmem>>, %arg8: memref<32x1xf32, #tpu.memory_space<vmem>>, %arg9: memref<1x1xf32, #tpu.memory_space<vmem>>, %arg10: memref<1x4x8x8xf32, #tpu.memory_space<vmem>>, %arg11: memref<1x2x16x8xf32, #tpu.memory_space<vmem>>, %arg12: memref<1x1x32x8xf32, #tpu.memory_space<vmem>>, %arg13: memref<1x1x8xf32, #tpu.memory_space<vmem>>, %arg14: memref<1x1x1xf32, #tpu.memory_space<vmem>>, %arg15: memref<4x8x9xf32, #tpu.memory_space<vmem>>, %arg16: memref<2x16x10xf32, #tpu.memory_space<vmem>>) attributes {dimension_semantics = [#tpu.dimension_semantics<parallel>], iteration_bounds = array<i64: 2>, scalar_prefetch = 0 : i64, scratch_operands = 2 : i64, tpu.core_type = #tpu.core_type<tc>, window_params = [{transform_indices = @transform_0, window_bounds = array<i64: 1, 8, 4, 9>}, {pipeline_mode = #tpu.pipeline_mode<synchronous>, transform_indices = @transform_1, window_bounds = array<i64: 8, 20>}, {pipeline_mode = #tpu.pipeline_mode<synchronous>, transform_indices = @transform_2, window_bounds = array<i64: 8, 1>}, {pipeline_mode = #tpu.pipeline_mode<synchronous>, transform_indices = @transform_3, window_bounds = array<i64: 16, 40>}, {pipeline_mode = #tpu.pipeline_mode<synchronous>, transform_indices = @transform_4, window_bounds = array<i64: 16, 1>}, {pipeline_mode = #tpu.pipeline_mode<synchronous>, transform_indices = @transform_5, window_bounds = array<i64: 32, 80>}, {pipeline_mode = #tpu.pipeline_mode<synchronous>, transform_indices = @transform_6, window_bounds = array<i64: 32, 1>}, {pipeline_mode = #tpu.pipeline_mode<synchronous>, transform_indices = @transform_7, window_bounds = array<i64: 32, 1>}, {pipeline_mode = #tpu.pipeline_mode<synchronous>, transform_indices = @transform_8, window_bounds = array<i64: 1, 1>}, {transform_indices = @transform_9, window_bounds = array<i64: 1, 4, 8, 8>}, {transform_indices = @transform_10, window_bounds = array<i64: 1, 2, 16, 8>}, {transform_indices = @transform_11, window_bounds = array<i64: 1, 1, 32, 8>}, {transform_indices = @transform_12, window_bounds = array<i64: 1, 1, 8>}, {transform_indices = @transform_13, window_bounds = array<i64: 1, 1, 1>}]} {
    %cst = arith.constant 0.000000e+00 : f32
    %0 = vector.broadcast %cst : f32 to vector<8x1xf32>
    %c0 = arith.constant 0 : index
    %c0_0 = arith.constant 0 : index
    %c0_1 = arith.constant 0 : index
    %1 = vector.load %arg15[%c0, %c0_0, %c0_1] : memref<4x8x9xf32, #tpu.memory_space<vmem>>, vector<1x8x1xf32>
    %2 = vector.shape_cast %1 : vector<1x8x1xf32> to vector<8x1xf32>
    %3 = vector.shape_cast %0 : vector<8x1xf32> to vector<1x8x1xf32>
    tpu.vector_store %arg15[%c0, %c0_0, %c0_1], %3 {strides = array<i32>} : memref<4x8x9xf32, #tpu.memory_space<vmem>>, vector<1x8x1xf32>,
    %c1 = arith.constant 1 : index
    %c0_2 = arith.constant 0 : index
    %c0_3 = arith.constant 0 : index
    %4 = vector.load %arg15[%c1, %c0_2, %c0_3] : memref<4x8x9xf32, #tpu.memory_space<vmem>>, vector<1x8x1xf32>
    %5 = vector.shape_cast %4 : vector<1x8x1xf32> to vector<8x1xf32>
    %6 = vector.shape_cast %0 : vector<8x1xf32> to vector<1x8x1xf32>
    tpu.vector_store %arg15[%c1, %c0_2, %c0_3], %6 {strides = array<i32>} : memref<4x8x9xf32, #tpu.memory_space<vmem>>, vector<1x8x1xf32>,
    %c2 = arith.constant 2 : index
    %c0_4 = arith.constant 0 : index
    %c8 = arith.constant 8 : index
    %7 = vector.load %arg15[%c2, %c0_4, %c8] : memref<4x8x9xf32, #tpu.memory_space<vmem>>, vector<1x8x1xf32>
    %8 = vector.shape_cast %7 : vector<1x8x1xf32> to vector<8x1xf32>
    %9 = vector.shape_cast %0 : vector<8x1xf32> to vector<1x8x1xf32>
    tpu.vector_store %arg15[%c2, %c0_4, %c8], %9 {strides = array<i32>} : memref<4x8x9xf32, #tpu.memory_space<vmem>>, vector<1x8x1xf32>,
    %c3 = arith.constant 3 : index
    %c0_5 = arith.constant 0 : index
    %c8_6 = arith.constant 8 : index
    %10 = vector.load %arg15[%c3, %c0_5, %c8_6] : memref<4x8x9xf32, #tpu.memory_space<vmem>>, vector<1x8x1xf32>
    %11 = vector.shape_cast %10 : vector<1x8x1xf32> to vector<8x1xf32>
    %12 = vector.shape_cast %0 : vector<8x1xf32> to vector<1x8x1xf32>
    tpu.vector_store %arg15[%c3, %c0_5, %c8_6], %12 {strides = array<i32>} : memref<4x8x9xf32, #tpu.memory_space<vmem>>, vector<1x8x1xf32>,
    %cst_7 = arith.constant 0.000000e+00 : f32
    %13 = vector.broadcast %cst_7 : f32 to vector<16x1xf32>
    %c0_8 = arith.constant 0 : index
    %c0_9 = arith.constant 0 : index
    %c0_10 = arith.constant 0 : index
    %14 = vector.load %arg16[%c0_8, %c0_9, %c0_10] : memref<2x16x10xf32, #tpu.memory_space<vmem>>, vector<1x16x1xf32>
    %15 = vector.shape_cast %14 : vector<1x16x1xf32> to vector<16x1xf32>
    %16 = vector.shape_cast %13 : vector<16x1xf32> to vector<1x16x1xf32>
    tpu.vector_store %arg16[%c0_8, %c0_9, %c0_10], %16 {strides = array<i32>} : memref<2x16x10xf32, #tpu.memory_space<vmem>>, vector<1x16x1xf32>,
    %c1_11 = arith.constant 1 : index
    %c0_12 = arith.constant 0 : index
    %c0_13 = arith.constant 0 : index
    %17 = vector.load %arg16[%c1_11, %c0_12, %c0_13] : memref<2x16x10xf32, #tpu.memory_space<vmem>>, vector<1x16x1xf32>
    %18 = vector.shape_cast %17 : vector<1x16x1xf32> to vector<16x1xf32>
    %19 = vector.shape_cast %13 : vector<16x1xf32> to vector<1x16x1xf32>
    tpu.vector_store %arg16[%c1_11, %c0_12, %c0_13], %19 {strides = array<i32>} : memref<2x16x10xf32, #tpu.memory_space<vmem>>, vector<1x16x1xf32>,
    %c0_14 = arith.constant 0 : index
    %c0_15 = arith.constant 0 : index
    %c9 = arith.constant 9 : index
    %20 = vector.load %arg16[%c0_14, %c0_15, %c9] : memref<2x16x10xf32, #tpu.memory_space<vmem>>, vector<1x16x1xf32>
    %21 = vector.shape_cast %20 : vector<1x16x1xf32> to vector<16x1xf32>
    %22 = vector.shape_cast %13 : vector<16x1xf32> to vector<1x16x1xf32>
    tpu.vector_store %arg16[%c0_14, %c0_15, %c9], %22 {strides = array<i32>} : memref<2x16x10xf32, #tpu.memory_space<vmem>>, vector<1x16x1xf32>,
    %c1_16 = arith.constant 1 : index
    %c0_17 = arith.constant 0 : index
    %c9_18 = arith.constant 9 : index
    %23 = vector.load %arg16[%c1_16, %c0_17, %c9_18] : memref<2x16x10xf32, #tpu.memory_space<vmem>>, vector<1x16x1xf32>
    %24 = vector.shape_cast %23 : vector<1x16x1xf32> to vector<16x1xf32>
    %25 = vector.shape_cast %13 : vector<16x1xf32> to vector<1x16x1xf32>
    tpu.vector_store %arg16[%c1_16, %c0_17, %c9_18], %25 {strides = array<i32>} : memref<2x16x10xf32, #tpu.memory_space<vmem>>, vector<1x16x1xf32>,
    %c0_19 = arith.constant 0 : index
    %c0_20 = arith.constant 0 : index
    %26 = vector.load %arg2[%c0_19, %c0_20] : memref<8x20xf32, #tpu.memory_space<vmem>>, vector<8x20xf32>
    %c0_21 = arith.constant 0 : index
    %c0_22 = arith.constant 0 : index
    %27 = vector.load %arg3[%c0_21, %c0_22] : memref<8x1xf32, #tpu.memory_space<vmem>>, vector<8x1xf32>
    %c0_23 = arith.constant 0 : index
    %c0_24 = arith.constant 0 : index
    %c0_25 = arith.constant 0 : index
    %c0_26 = arith.constant 0 : index
    %28 = vector.load %arg1[%c0_23, %c0_24, %c0_25, %c0_26] : memref<1x8x4x9xf32, #tpu.memory_space<vmem>>, vector<1x1x4x8xf32>
    %29 = vector.shape_cast %28 : vector<1x1x4x8xf32> to vector<4x8xf32>
    %c0_27 = arith.constant 0 : index
    %c1_28 = arith.constant 1 : index
    %c0_29 = arith.constant 0 : index
    %c0_30 = arith.constant 0 : index
    %30 = vector.load %arg1[%c0_27, %c1_28, %c0_29, %c0_30] : memref<1x8x4x9xf32, #tpu.memory_space<vmem>>, vector<1x1x4x8xf32>
    %31 = vector.shape_cast %30 : vector<1x1x4x8xf32> to vector<4x8xf32>
    %c0_31 = arith.constant 0 : index
    %c2_32 = arith.constant 2 : index
    %c0_33 = arith.constant 0 : index
    %c0_34 = arith.constant 0 : index
    %32 = vector.load %arg1[%c0_31, %c2_32, %c0_33, %c0_34] : memref<1x8x4x9xf32, #tpu.memory_space<vmem>>, vector<1x1x4x8xf32>
    %33 = vector.shape_cast %32 : vector<1x1x4x8xf32> to vector<4x8xf32>
    %c0_35 = arith.constant 0 : index
    %c3_36 = arith.constant 3 : index
    %c0_37 = arith.constant 0 : index
    %c0_38 = arith.constant 0 : index
    %34 = vector.load %arg1[%c0_35, %c3_36, %c0_37, %c0_38] : memref<1x8x4x9xf32, #tpu.memory_space<vmem>>, vector<1x1x4x8xf32>
    %35 = vector.shape_cast %34 : vector<1x1x4x8xf32> to vector<4x8xf32>
    %c0_39 = arith.constant 0 : index
    %c4 = arith.constant 4 : index
    %c0_40 = arith.constant 0 : index
    %c0_41 = arith.constant 0 : index
    %36 = vector.load %arg1[%c0_39, %c4, %c0_40, %c0_41] : memref<1x8x4x9xf32, #tpu.memory_space<vmem>>, vector<1x1x4x8xf32>
    %37 = vector.shape_cast %36 : vector<1x1x4x8xf32> to vector<4x8xf32>
    %38 = tpu.concatenate %29, %31, %33, %35, %37 in 0 : vector<4x8xf32>, vector<4x8xf32>, vector<4x8xf32>, vector<4x8xf32>, vector<4x8xf32> -> vector<20x8xf32>
    %cst_42 = arith.constant dense<0.000000e+00> : vector<8x8xf32>
    %39 = tpu.matmul %26, %38, %cst_42 {dimension_numbers = #tpu.dot_dimension_numbers<[1], [0], [0], [1], [0, 0, 1, 1], [], []>} : vector<8x20xf32>, vector<20x8xf32>, vector<8x8xf32> -> vector<8x8xf32>
    %40 = vector.broadcast %27 : vector<8x1xf32> to vector<8x8xf32>
    %41 = arith.addf %39, %40 : vector<8x8xf32>
    %c0_43 = arith.constant 0 : index
    %c0_44 = arith.constant 0 : index
    %c0_45 = arith.constant 0 : index
    %c0_46 = arith.constant 0 : index
    %42 = vector.load %arg10[%c0_43, %c0_44, %c0_45, %c0_46] : memref<1x4x8x8xf32, #tpu.memory_space<vmem>>, vector<1x1x8x8xf32>
    %43 = vector.shape_cast %42 : vector<1x1x8x8xf32> to vector<8x8xf32>
    %44 = vector.shape_cast %41 : vector<8x8xf32> to vector<1x1x8x8xf32>
    tpu.vector_store %arg10[%c0_43, %c0_44, %c0_45, %c0_46], %44 {strides = array<i32>} : memref<1x4x8x8xf32, #tpu.memory_space<vmem>>, vector<1x1x8x8xf32>,
    %cst_47 = arith.constant 2.000000e-01 : f32
    %45 = vector.broadcast %cst_47 : f32 to vector<8x8xf32>
    %46 = arith.mulf %45, %41 : vector<8x8xf32>
    %47 = arith.maximumf %41, %46 : vector<8x8xf32>
    %c2_48 = arith.constant 2 : index
    %c0_49 = arith.constant 0 : index
    %c0_50 = arith.constant 0 : index
    %48 = vector.load %arg15[%c2_48, %c0_49, %c0_50] : memref<4x8x9xf32, #tpu.memory_space<vmem>>, vector<1x8x8xf32>
    %49 = vector.shape_cast %48 : vector<1x8x8xf32> to vector<8x8xf32>
    %50 = vector.shape_cast %47 : vector<8x8xf32> to vector<1x8x8xf32>
    tpu.vector_store %arg15[%c2_48, %c0_49, %c0_50], %50 {strides = array<i32>} : memref<4x8x9xf32, #tpu.memory_space<vmem>>, vector<1x8x8xf32>,
    %c0_51 = arith.constant 0 : index
    %c2_52 = arith.constant 2 : index
    %c0_53 = arith.constant 0 : index
    %c0_54 = arith.constant 0 : index
    %51 = vector.load %arg1[%c0_51, %c2_52, %c0_53, %c0_54] : memref<1x8x4x9xf32, #tpu.memory_space<vmem>>, vector<1x1x4x8xf32>
    %52 = vector.shape_cast %51 : vector<1x1x4x8xf32> to vector<4x8xf32>
    %c0_55 = arith.constant 0 : index
    %c3_56 = arith.constant 3 : index
    %c0_57 = arith.constant 0 : index
    %c0_58 = arith.constant 0 : index
    %53 = vector.load %arg1[%c0_55, %c3_56, %c0_57, %c0_58] : memref<1x8x4x9xf32, #tpu.memory_space<vmem>>, vector<1x1x4x8xf32>
    %54 = vector.shape_cast %53 : vector<1x1x4x8xf32> to vector<4x8xf32>
    %c0_59 = arith.constant 0 : index
    %c4_60 = arith.constant 4 : index
    %c0_61 = arith.constant 0 : index
    %c0_62 = arith.constant 0 : index
    %55 = vector.load %arg1[%c0_59, %c4_60, %c0_61, %c0_62] : memref<1x8x4x9xf32, #tpu.memory_space<vmem>>, vector<1x1x4x8xf32>
    %56 = vector.shape_cast %55 : vector<1x1x4x8xf32> to vector<4x8xf32>
    %c0_63 = arith.constant 0 : index
    %c5 = arith.constant 5 : index
    %c0_64 = arith.constant 0 : index
    %c0_65 = arith.constant 0 : index
    %57 = vector.load %arg1[%c0_63, %c5, %c0_64, %c0_65] : memref<1x8x4x9xf32, #tpu.memory_space<vmem>>, vector<1x1x4x8xf32>
    %58 = vector.shape_cast %57 : vector<1x1x4x8xf32> to vector<4x8xf32>
    %c0_66 = arith.constant 0 : index
    %c6 = arith.constant 6 : index
    %c0_67 = arith.constant 0 : index
    %c0_68 = arith.constant 0 : index
    %59 = vector.load %arg1[%c0_66, %c6, %c0_67, %c0_68] : memref<1x8x4x9xf32, #tpu.memory_space<vmem>>, vector<1x1x4x8xf32>
    %60 = vector.shape_cast %59 : vector<1x1x4x8xf32> to vector<4x8xf32>
    %61 = tpu.concatenate %52, %54, %56, %58, %60 in 0 : vector<4x8xf32>, vector<4x8xf32>, vector<4x8xf32>, vector<4x8xf32>, vector<4x8xf32> -> vector<20x8xf32>
    %cst_69 = arith.constant dense<0.000000e+00> : vector<8x8xf32>
    %62 = tpu.matmul %26, %61, %cst_69 {dimension_numbers = #tpu.dot_dimension_numbers<[1], [0], [0], [1], [0, 0, 1, 1], [], []>} : vector<8x20xf32>, vector<20x8xf32>, vector<8x8xf32> -> vector<8x8xf32>
    %63 = vector.broadcast %27 : vector<8x1xf32> to vector<8x8xf32>
    %64 = arith.addf %62, %63 : vector<8x8xf32>
    %c0_70 = arith.constant 0 : index
    %c1_71 = arith.constant 1 : index
    %c0_72 = arith.constant 0 : index
    %c0_73 = arith.constant 0 : index
    %65 = vector.load %arg10[%c0_70, %c1_71, %c0_72, %c0_73] : memref<1x4x8x8xf32, #tpu.memory_space<vmem>>, vector<1x1x8x8xf32>
    %66 = vector.shape_cast %65 : vector<1x1x8x8xf32> to vector<8x8xf32>
    %67 = vector.shape_cast %64 : vector<8x8xf32> to vector<1x1x8x8xf32>
    tpu.vector_store %arg10[%c0_70, %c1_71, %c0_72, %c0_73], %67 {strides = array<i32>} : memref<1x4x8x8xf32, #tpu.memory_space<vmem>>, vector<1x1x8x8xf32>,
    %cst_74 = arith.constant 2.000000e-01 : f32
    %68 = vector.broadcast %cst_74 : f32 to vector<8x8xf32>
    %69 = arith.mulf %68, %64 : vector<8x8xf32>
    %70 = arith.maximumf %64, %69 : vector<8x8xf32>
    %c3_75 = arith.constant 3 : index
    %c0_76 = arith.constant 0 : index
    %c0_77 = arith.constant 0 : index
    %71 = vector.load %arg15[%c3_75, %c0_76, %c0_77] : memref<4x8x9xf32, #tpu.memory_space<vmem>>, vector<1x8x8xf32>
    %72 = vector.shape_cast %71 : vector<1x8x8xf32> to vector<8x8xf32>
    %73 = vector.shape_cast %70 : vector<8x8xf32> to vector<1x8x8xf32>
    tpu.vector_store %arg15[%c3_75, %c0_76, %c0_77], %73 {strides = array<i32>} : memref<4x8x9xf32, #tpu.memory_space<vmem>>, vector<1x8x8xf32>,
    %c0_78 = arith.constant 0 : index
    %c4_79 = arith.constant 4 : index
    %c0_80 = arith.constant 0 : index
    %c0_81 = arith.constant 0 : index
    %74 = vector.load %arg1[%c0_78, %c4_79, %c0_80, %c0_81] : memref<1x8x4x9xf32, #tpu.memory_space<vmem>>, vector<1x1x4x8xf32>
    %75 = vector.shape_cast %74 : vector<1x1x4x8xf32> to vector<4x8xf32>
    %c0_82 = arith.constant 0 : index
    %c5_83 = arith.constant 5 : index
    %c0_84 = arith.constant 0 : index
    %c0_85 = arith.constant 0 : index
    %76 = vector.load %arg1[%c0_82, %c5_83, %c0_84, %c0_85] : memref<1x8x4x9xf32, #tpu.memory_space<vmem>>, vector<1x1x4x8xf32>
    %77 = vector.shape_cast %76 : vector<1x1x4x8xf32> to vector<4x8xf32>
    %c0_86 = arith.constant 0 : index
    %c6_87 = arith.constant 6 : index
    %c0_88 = arith.constant 0 : index
    %c0_89 = arith.constant 0 : index
    %78 = vector.load %arg1[%c0_86, %c6_87, %c0_88, %c0_89] : memref<1x8x4x9xf32, #tpu.memory_space<vmem>>, vector<1x1x4x8xf32>
    %79 = vector.shape_cast %78 : vector<1x1x4x8xf32> to vector<4x8xf32>
    %c0_90 = arith.constant 0 : index
    %c7 = arith.constant 7 : index
    %c0_91 = arith.constant 0 : index
    %c0_92 = arith.constant 0 : index
    %80 = vector.load %arg1[%c0_90, %c7, %c0_91, %c0_92] : memref<1x8x4x9xf32, #tpu.memory_space<vmem>>, vector<1x1x4x8xf32>
    %81 = vector.shape_cast %80 : vector<1x1x4x8xf32> to vector<4x8xf32>
    %c0_93 = arith.constant 0 : index
    %c0_94 = arith.constant 0 : index
    %c0_95 = arith.constant 0 : index
    %c1_96 = arith.constant 1 : index
    %82 = vector.load %arg1[%c0_93, %c0_94, %c0_95, %c1_96] : memref<1x8x4x9xf32, #tpu.memory_space<vmem>>, vector<1x1x4x8xf32>
    %83 = vector.shape_cast %82 : vector<1x1x4x8xf32> to vector<4x8xf32>
    %84 = tpu.concatenate %75, %77, %79, %81, %83 in 0 : vector<4x8xf32>, vector<4x8xf32>, vector<4x8xf32>, vector<4x8xf32>, vector<4x8xf32> -> vector<20x8xf32>
    %cst_97 = arith.constant dense<0.000000e+00> : vector<8x8xf32>
    %85 = tpu.matmul %26, %84, %cst_97 {dimension_numbers = #tpu.dot_dimension_numbers<[1], [0], [0], [1], [0, 0, 1, 1], [], []>} : vector<8x20xf32>, vector<20x8xf32>, vector<8x8xf32> -> vector<8x8xf32>
    %86 = vector.broadcast %27 : vector<8x1xf32> to vector<8x8xf32>
    %87 = arith.addf %85, %86 : vector<8x8xf32>
    %c0_98 = arith.constant 0 : index
    %c2_99 = arith.constant 2 : index
    %c0_100 = arith.constant 0 : index
    %c0_101 = arith.constant 0 : index
    %88 = vector.load %arg10[%c0_98, %c2_99, %c0_100, %c0_101] : memref<1x4x8x8xf32, #tpu.memory_space<vmem>>, vector<1x1x8x8xf32>
    %89 = vector.shape_cast %88 : vector<1x1x8x8xf32> to vector<8x8xf32>
    %90 = vector.shape_cast %87 : vector<8x8xf32> to vector<1x1x8x8xf32>
    tpu.vector_store %arg10[%c0_98, %c2_99, %c0_100, %c0_101], %90 {strides = array<i32>} : memref<1x4x8x8xf32, #tpu.memory_space<vmem>>, vector<1x1x8x8xf32>,
    %cst_102 = arith.constant 2.000000e-01 : f32
    %91 = vector.broadcast %cst_102 : f32 to vector<8x8xf32>
    %92 = arith.mulf %91, %87 : vector<8x8xf32>
    %93 = arith.maximumf %87, %92 : vector<8x8xf32>
    %c0_103 = arith.constant 0 : index
    %c0_104 = arith.constant 0 : index
    %c1_105 = arith.constant 1 : index
    %94 = vector.load %arg15[%c0_103, %c0_104, %c1_105] : memref<4x8x9xf32, #tpu.memory_space<vmem>>, vector<1x8x8xf32>
    %95 = vector.shape_cast %94 : vector<1x8x8xf32> to vector<8x8xf32>
    %96 = vector.shape_cast %93 : vector<8x8xf32> to vector<1x8x8xf32>
    tpu.vector_store %arg15[%c0_103, %c0_104, %c1_105], %96 {strides = array<i32>} : memref<4x8x9xf32, #tpu.memory_space<vmem>>, vector<1x8x8xf32>,
    %c0_106 = arith.constant 0 : index
    %c6_107 = arith.constant 6 : index
    %c0_108 = arith.constant 0 : index
    %c0_109 = arith.constant 0 : index
    %97 = vector.load %arg1[%c0_106, %c6_107, %c0_108, %c0_109] : memref<1x8x4x9xf32, #tpu.memory_space<vmem>>, vector<1x1x4x8xf32>
    %98 = vector.shape_cast %97 : vector<1x1x4x8xf32> to vector<4x8xf32>
    %c0_110 = arith.constant 0 : index
    %c7_111 = arith.constant 7 : index
    %c0_112 = arith.constant 0 : index
    %c0_113 = arith.constant 0 : index
    %99 = vector.load %arg1[%c0_110, %c7_111, %c0_112, %c0_113] : memref<1x8x4x9xf32, #tpu.memory_space<vmem>>, vector<1x1x4x8xf32>
    %100 = vector.shape_cast %99 : vector<1x1x4x8xf32> to vector<4x8xf32>
    %c0_114 = arith.constant 0 : index
    %c0_115 = arith.constant 0 : index
    %c0_116 = arith.constant 0 : index
    %c1_117 = arith.constant 1 : index
    %101 = vector.load %arg1[%c0_114, %c0_115, %c0_116, %c1_117] : memref<1x8x4x9xf32, #tpu.memory_space<vmem>>, vector<1x1x4x8xf32>
    %102 = vector.shape_cast %101 : vector<1x1x4x8xf32> to vector<4x8xf32>
    %c0_118 = arith.constant 0 : index
    %c1_119 = arith.constant 1 : index
    %c0_120 = arith.constant 0 : index
    %c1_121 = arith.constant 1 : index
    %103 = vector.load %arg1[%c0_118, %c1_119, %c0_120, %c1_121] : memref<1x8x4x9xf32, #tpu.memory_space<vmem>>, vector<1x1x4x8xf32>
    %104 = vector.shape_cast %103 : vector<1x1x4x8xf32> to vector<4x8xf32>
    %c0_122 = arith.constant 0 : index
    %c2_123 = arith.constant 2 : index
    %c0_124 = arith.constant 0 : index
    %c1_125 = arith.constant 1 : index
    %105 = vector.load %arg1[%c0_122, %c2_123, %c0_124, %c1_125] : memref<1x8x4x9xf32, #tpu.memory_space<vmem>>, vector<1x1x4x8xf32>
    %106 = vector.shape_cast %105 : vector<1x1x4x8xf32> to vector<4x8xf32>
    %107 = tpu.concatenate %98, %100, %102, %104, %106 in 0 : vector<4x8xf32>, vector<4x8xf32>, vector<4x8xf32>, vector<4x8xf32>, vector<4x8xf32> -> vector<20x8xf32>
    %cst_126 = arith.constant dense<0.000000e+00> : vector<8x8xf32>
    %108 = tpu.matmul %26, %107, %cst_126 {dimension_numbers = #tpu.dot_dimension_numbers<[1], [0], [0], [1], [0, 0, 1, 1], [], []>} : vector<8x20xf32>, vector<20x8xf32>, vector<8x8xf32> -> vector<8x8xf32>
    %109 = vector.broadcast %27 : vector<8x1xf32> to vector<8x8xf32>
    %110 = arith.addf %108, %109 : vector<8x8xf32>
    %c0_127 = arith.constant 0 : index
    %c3_128 = arith.constant 3 : index
    %c0_129 = arith.constant 0 : index
    %c0_130 = arith.constant 0 : index
    %111 = vector.load %arg10[%c0_127, %c3_128, %c0_129, %c0_130] : memref<1x4x8x8xf32, #tpu.memory_space<vmem>>, vector<1x1x8x8xf32>
    %112 = vector.shape_cast %111 : vector<1x1x8x8xf32> to vector<8x8xf32>
    %113 = vector.shape_cast %110 : vector<8x8xf32> to vector<1x1x8x8xf32>
    tpu.vector_store %arg10[%c0_127, %c3_128, %c0_129, %c0_130], %113 {strides = array<i32>} : memref<1x4x8x8xf32, #tpu.memory_space<vmem>>, vector<1x1x8x8xf32>,
    %cst_131 = arith.constant 2.000000e-01 : f32
    %114 = vector.broadcast %cst_131 : f32 to vector<8x8xf32>
    %115 = arith.mulf %114, %110 : vector<8x8xf32>
    %116 = arith.maximumf %110, %115 : vector<8x8xf32>
    %c1_132 = arith.constant 1 : index
    %c0_133 = arith.constant 0 : index
    %c1_134 = arith.constant 1 : index
    %117 = vector.load %arg15[%c1_132, %c0_133, %c1_134] : memref<4x8x9xf32, #tpu.memory_space<vmem>>, vector<1x8x8xf32>
    %118 = vector.shape_cast %117 : vector<1x8x8xf32> to vector<8x8xf32>
    %119 = vector.shape_cast %116 : vector<8x8xf32> to vector<1x8x8xf32>
    tpu.vector_store %arg15[%c1_132, %c0_133, %c1_134], %119 {strides = array<i32>} : memref<4x8x9xf32, #tpu.memory_space<vmem>>, vector<1x8x8xf32>,
    %c0_135 = arith.constant 0 : index
    %c0_136 = arith.constant 0 : index
    %120 = vector.load %arg4[%c0_135, %c0_136] : memref<16x40xf32, #tpu.memory_space<vmem>>, vector<16x40xf32>
    %c0_137 = arith.constant 0 : index
    %c0_138 = arith.constant 0 : index
    %121 = vector.load %arg5[%c0_137, %c0_138] : memref<16x1xf32, #tpu.memory_space<vmem>>, vector<16x1xf32>
    %c0_139 = arith.constant 0 : index
    %c0_140 = arith.constant 0 : index
    %c0_141 = arith.constant 0 : index
    %122 = vector.load %arg15[%c0_139, %c0_140, %c0_141] : memref<4x8x9xf32, #tpu.memory_space<vmem>>, vector<1x8x8xf32>
    %123 = vector.shape_cast %122 : vector<1x8x8xf32> to vector<8x8xf32>
    %c1_142 = arith.constant 1 : index
    %c0_143 = arith.constant 0 : index
    %c0_144 = arith.constant 0 : index
    %124 = vector.load %arg15[%c1_142, %c0_143, %c0_144] : memref<4x8x9xf32, #tpu.memory_space<vmem>>, vector<1x8x8xf32>
    %125 = vector.shape_cast %124 : vector<1x8x8xf32> to vector<8x8xf32>
    %c2_145 = arith.constant 2 : index
    %c0_146 = arith.constant 0 : index
    %c0_147 = arith.constant 0 : index
    %126 = vector.load %arg15[%c2_145, %c0_146, %c0_147] : memref<4x8x9xf32, #tpu.memory_space<vmem>>, vector<1x8x8xf32>
    %127 = vector.shape_cast %126 : vector<1x8x8xf32> to vector<8x8xf32>
    %c3_148 = arith.constant 3 : index
    %c0_149 = arith.constant 0 : index
    %c0_150 = arith.constant 0 : index
    %128 = vector.load %arg15[%c3_148, %c0_149, %c0_150] : memref<4x8x9xf32, #tpu.memory_space<vmem>>, vector<1x8x8xf32>
    %129 = vector.shape_cast %128 : vector<1x8x8xf32> to vector<8x8xf32>
    %c0_151 = arith.constant 0 : index
    %c0_152 = arith.constant 0 : index
    %c1_153 = arith.constant 1 : index
    %130 = vector.load %arg15[%c0_151, %c0_152, %c1_153] : memref<4x8x9xf32, #tpu.memory_space<vmem>>, vector<1x8x8xf32>
    %131 = vector.shape_cast %130 : vector<1x8x8xf32> to vector<8x8xf32>
    %132 = tpu.concatenate %123, %125, %127, %129, %131 in 0 : vector<8x8xf32>, vector<8x8xf32>, vector<8x8xf32>, vector<8x8xf32>, vector<8x8xf32> -> vector<40x8xf32>
    %cst_154 = arith.constant dense<0.000000e+00> : vector<16x8xf32>
    %133 = tpu.matmul %120, %132, %cst_154 {dimension_numbers = #tpu.dot_dimension_numbers<[1], [0], [0], [1], [0, 0, 1, 1], [], []>} : vector<16x40xf32>, vector<40x8xf32>, vector<16x8xf32> -> vector<16x8xf32>
    %134 = vector.broadcast %121 : vector<16x1xf32> to vector<16x8xf32>
    %135 = arith.addf %133, %134 : vector<16x8xf32>
    %c0_155 = arith.constant 0 : index
    %c0_156 = arith.constant 0 : index
    %c0_157 = arith.constant 0 : index
    %c0_158 = arith.constant 0 : index
    %136 = vector.load %arg11[%c0_155, %c0_156, %c0_157, %c0_158] : memref<1x2x16x8xf32, #tpu.memory_space<vmem>>, vector<1x1x16x8xf32>
    %137 = vector.shape_cast %136 : vector<1x1x16x8xf32> to vector<16x8xf32>
    %138 = vector.shape_cast %135 : vector<16x8xf32> to vector<1x1x16x8xf32>
    tpu.vector_store %arg11[%c0_155, %c0_156, %c0_157, %c0_158], %138 {strides = array<i32>} : memref<1x2x16x8xf32, #tpu.memory_space<vmem>>, vector<1x1x16x8xf32>,
    %cst_159 = arith.constant 2.000000e-01 : f32
    %139 = vector.broadcast %cst_159 : f32 to vector<16x8xf32>
    %140 = arith.mulf %139, %135 : vector<16x8xf32>
    %141 = arith.maximumf %135, %140 : vector<16x8xf32>
    %c0_160 = arith.constant 0 : index
    %c0_161 = arith.constant 0 : index
    %c1_162 = arith.constant 1 : index
    %142 = vector.load %arg16[%c0_160, %c0_161, %c1_162] : memref<2x16x10xf32, #tpu.memory_space<vmem>>, vector<1x16x8xf32>
    %143 = vector.shape_cast %142 : vector<1x16x8xf32> to vector<16x8xf32>
    %144 = vector.shape_cast %141 : vector<16x8xf32> to vector<1x16x8xf32>
    tpu.vector_store %arg16[%c0_160, %c0_161, %c1_162], %144 {strides = array<i32>} : memref<2x16x10xf32, #tpu.memory_space<vmem>>, vector<1x16x8xf32>,
    %c2_163 = arith.constant 2 : index
    %c0_164 = arith.constant 0 : index
    %c0_165 = arith.constant 0 : index
    %145 = vector.load %arg15[%c2_163, %c0_164, %c0_165] : memref<4x8x9xf32, #tpu.memory_space<vmem>>, vector<1x8x8xf32>
    %146 = vector.shape_cast %145 : vector<1x8x8xf32> to vector<8x8xf32>
    %c3_166 = arith.constant 3 : index
    %c0_167 = arith.constant 0 : index
    %c0_168 = arith.constant 0 : index
    %147 = vector.load %arg15[%c3_166, %c0_167, %c0_168] : memref<4x8x9xf32, #tpu.memory_space<vmem>>, vector<1x8x8xf32>
    %148 = vector.shape_cast %147 : vector<1x8x8xf32> to vector<8x8xf32>
    %c0_169 = arith.constant 0 : index
    %c0_170 = arith.constant 0 : index
    %c1_171 = arith.constant 1 : index
    %149 = vector.load %arg15[%c0_169, %c0_170, %c1_171] : memref<4x8x9xf32, #tpu.memory_space<vmem>>, vector<1x8x8xf32>
    %150 = vector.shape_cast %149 : vector<1x8x8xf32> to vector<8x8xf32>
    %c1_172 = arith.constant 1 : index
    %c0_173 = arith.constant 0 : index
    %c1_174 = arith.constant 1 : index
    %151 = vector.load %arg15[%c1_172, %c0_173, %c1_174] : memref<4x8x9xf32, #tpu.memory_space<vmem>>, vector<1x8x8xf32>
    %152 = vector.shape_cast %151 : vector<1x8x8xf32> to vector<8x8xf32>
    %c2_175 = arith.constant 2 : index
    %c0_176 = arith.constant 0 : index
    %c1_177 = arith.constant 1 : index
    %153 = vector.load %arg15[%c2_175, %c0_176, %c1_177] : memref<4x8x9xf32, #tpu.memory_space<vmem>>, vector<1x8x8xf32>
    %154 = vector.shape_cast %153 : vector<1x8x8xf32> to vector<8x8xf32>
    %155 = tpu.concatenate %146, %148, %150, %152, %154 in 0 : vector<8x8xf32>, vector<8x8xf32>, vector<8x8xf32>, vector<8x8xf32>, vector<8x8xf32> -> vector<40x8xf32>
    %cst_178 = arith.constant dense<0.000000e+00> : vector<16x8xf32>
    %156 = tpu.matmul %120, %155, %cst_178 {dimension_numbers = #tpu.dot_dimension_numbers<[1], [0], [0], [1], [0, 0, 1, 1], [], []>} : vector<16x40xf32>, vector<40x8xf32>, vector<16x8xf32> -> vector<16x8xf32>
    %157 = vector.broadcast %121 : vector<16x1xf32> to vector<16x8xf32>
    %158 = arith.addf %156, %157 : vector<16x8xf32>
    %c0_179 = arith.constant 0 : index
    %c1_180 = arith.constant 1 : index
    %c0_181 = arith.constant 0 : index
    %c0_182 = arith.constant 0 : index
    %159 = vector.load %arg11[%c0_179, %c1_180, %c0_181, %c0_182] : memref<1x2x16x8xf32, #tpu.memory_space<vmem>>, vector<1x1x16x8xf32>
    %160 = vector.shape_cast %159 : vector<1x1x16x8xf32> to vector<16x8xf32>
    %161 = vector.shape_cast %158 : vector<16x8xf32> to vector<1x1x16x8xf32>
    tpu.vector_store %arg11[%c0_179, %c1_180, %c0_181, %c0_182], %161 {strides = array<i32>} : memref<1x2x16x8xf32, #tpu.memory_space<vmem>>, vector<1x1x16x8xf32>,
    %cst_183 = arith.constant 2.000000e-01 : f32
    %162 = vector.broadcast %cst_183 : f32 to vector<16x8xf32>
    %163 = arith.mulf %162, %158 : vector<16x8xf32>
    %164 = arith.maximumf %158, %163 : vector<16x8xf32>
    %c1_184 = arith.constant 1 : index
    %c0_185 = arith.constant 0 : index
    %c1_186 = arith.constant 1 : index
    %165 = vector.load %arg16[%c1_184, %c0_185, %c1_186] : memref<2x16x10xf32, #tpu.memory_space<vmem>>, vector<1x16x8xf32>
    %166 = vector.shape_cast %165 : vector<1x16x8xf32> to vector<16x8xf32>
    %167 = vector.shape_cast %164 : vector<16x8xf32> to vector<1x16x8xf32>
    tpu.vector_store %arg16[%c1_184, %c0_185, %c1_186], %167 {strides = array<i32>} : memref<2x16x10xf32, #tpu.memory_space<vmem>>, vector<1x16x8xf32>,
    %c0_187 = arith.constant 0 : index
    %c0_188 = arith.constant 0 : index
    %168 = vector.load %arg6[%c0_187, %c0_188] : memref<32x80xf32, #tpu.memory_space<vmem>>, vector<32x80xf32>
    %c0_189 = arith.constant 0 : index
    %c0_190 = arith.constant 0 : index
    %169 = vector.load %arg7[%c0_189, %c0_190] : memref<32x1xf32, #tpu.memory_space<vmem>>, vector<32x1xf32>
    %c0_191 = arith.constant 0 : index
    %c0_192 = arith.constant 0 : index
    %c0_193 = arith.constant 0 : index
    %170 = vector.load %arg16[%c0_191, %c0_192, %c0_193] : memref<2x16x10xf32, #tpu.memory_space<vmem>>, vector<1x16x8xf32>
    %171 = vector.shape_cast %170 : vector<1x16x8xf32> to vector<16x8xf32>
    %c1_194 = arith.constant 1 : index
    %c0_195 = arith.constant 0 : index
    %c0_196 = arith.constant 0 : index
    %172 = vector.load %arg16[%c1_194, %c0_195, %c0_196] : memref<2x16x10xf32, #tpu.memory_space<vmem>>, vector<1x16x8xf32>
    %173 = vector.shape_cast %172 : vector<1x16x8xf32> to vector<16x8xf32>
    %c0_197 = arith.constant 0 : index
    %c0_198 = arith.constant 0 : index
    %c1_199 = arith.constant 1 : index
    %174 = vector.load %arg16[%c0_197, %c0_198, %c1_199] : memref<2x16x10xf32, #tpu.memory_space<vmem>>, vector<1x16x8xf32>
    %175 = vector.shape_cast %174 : vector<1x16x8xf32> to vector<16x8xf32>
    %c1_200 = arith.constant 1 : index
    %c0_201 = arith.constant 0 : index
    %c1_202 = arith.constant 1 : index
    %176 = vector.load %arg16[%c1_200, %c0_201, %c1_202] : memref<2x16x10xf32, #tpu.memory_space<vmem>>, vector<1x16x8xf32>
    %177 = vector.shape_cast %176 : vector<1x16x8xf32> to vector<16x8xf32>
    %c0_203 = arith.constant 0 : index
    %c0_204 = arith.constant 0 : index
    %c2_205 = arith.constant 2 : index
    %178 = vector.load %arg16[%c0_203, %c0_204, %c2_205] : memref<2x16x10xf32, #tpu.memory_space<vmem>>, vector<1x16x8xf32>
    %179 = vector.shape_cast %178 : vector<1x16x8xf32> to vector<16x8xf32>
    %180 = tpu.concatenate %171, %173, %175, %177, %179 in 0 : vector<16x8xf32>, vector<16x8xf32>, vector<16x8xf32>, vector<16x8xf32>, vector<16x8xf32> -> vector<80x8xf32>
    %cst_206 = arith.constant dense<0.000000e+00> : vector<32x8xf32>
    %181 = tpu.matmul %168, %180, %cst_206 {dimension_numbers = #tpu.dot_dimension_numbers<[1], [0], [0], [1], [0, 0, 1, 1], [], []>} : vector<32x80xf32>, vector<80x8xf32>, vector<32x8xf32> -> vector<32x8xf32>
    %182 = vector.broadcast %169 : vector<32x1xf32> to vector<32x8xf32>
    %183 = arith.addf %181, %182 : vector<32x8xf32>
    %c0_207 = arith.constant 0 : index
    %c0_208 = arith.constant 0 : index
    %c0_209 = arith.constant 0 : index
    %c0_210 = arith.constant 0 : index
    %184 = vector.load %arg12[%c0_207, %c0_208, %c0_209, %c0_210] : memref<1x1x32x8xf32, #tpu.memory_space<vmem>>, vector<1x1x32x8xf32>
    %185 = vector.shape_cast %184 : vector<1x1x32x8xf32> to vector<32x8xf32>
    %186 = vector.shape_cast %183 : vector<32x8xf32> to vector<1x1x32x8xf32>
    tpu.vector_store %arg12[%c0_207, %c0_208, %c0_209, %c0_210], %186 {strides = array<i32>} : memref<1x1x32x8xf32, #tpu.memory_space<vmem>>, vector<1x1x32x8xf32>,
    %cst_211 = arith.constant 2.000000e-01 : f32
    %187 = vector.broadcast %cst_211 : f32 to vector<32x8xf32>
    %188 = arith.mulf %187, %183 : vector<32x8xf32>
    %189 = arith.maximumf %183, %188 : vector<32x8xf32>
    %c0_212 = arith.constant 0 : index
    %c0_213 = arith.constant 0 : index
    %190 = vector.load %arg8[%c0_212, %c0_213] : memref<32x1xf32, #tpu.memory_space<vmem>>, vector<32x1xf32>
    %191 = vector.broadcast %190 : vector<32x1xf32> to vector<32x8xf32>
    %192 = arith.mulf %191, %189 : vector<32x8xf32>
    %cst_214 = arith.constant dense<0.000000e+00> : vector<8xf32>
    %193 = vector.multi_reduction <add>, %192, %cst_214 [0] : vector<32x8xf32> to vector<8xf32>
    %194 = vector.shape_cast %193 : vector<8xf32> to vector<1x8xf32>
    %c0_215 = arith.constant 0 : index
    %c0_216 = arith.constant 0 : index
    %195 = vector.load %arg9[%c0_215, %c0_216] : memref<1x1xf32, #tpu.memory_space<vmem>>, vector<1x1xf32>
    %196 = vector.broadcast %195 : vector<1x1xf32> to vector<1x8xf32>
    %197 = arith.addf %194, %196 : vector<1x8xf32>
    %c0_217 = arith.constant 0 : index
    %c0_218 = arith.constant 0 : index
    %c0_219 = arith.constant 0 : index
    %198 = vector.load %arg13[%c0_217, %c0_218, %c0_219] : memref<1x1x8xf32, #tpu.memory_space<vmem>>, vector<1x1x8xf32>
    %199 = vector.shape_cast %198 : vector<1x1x8xf32> to vector<1x8xf32>
    %200 = vector.shape_cast %197 : vector<1x8xf32> to vector<1x1x8xf32>
    tpu.vector_store %arg13[%c0_217, %c0_218, %c0_219], %200 {strides = array<i32>} : memref<1x1x8xf32, #tpu.memory_space<vmem>>, vector<1x1x8xf32>,
    %cst_220 = arith.constant dense<0.000000e+00> : vector<1xf32>
    %201 = vector.multi_reduction <add>, %197, %cst_220 [1] : vector<1x8xf32> to vector<1xf32>
    %202 = vector.shape_cast %201 : vector<1xf32> to vector<1x1xf32>
    %cst_221 = arith.constant dense<0.000000e+00> : vector<1xf32>
    %203 = vector.multi_reduction <add>, %202, %cst_221 [0] : vector<1x1xf32> to vector<1xf32>
    %204 = vector.shape_cast %203 : vector<1xf32> to vector<1x1xf32>
    %cst_222 = arith.constant 1.250000e-01 : f32
    %205 = vector.broadcast %cst_222 : f32 to vector<1x1xf32>
    %206 = arith.mulf %204, %205 : vector<1x1xf32>
    %207 = vector.shape_cast %206 : vector<1x1xf32> to vector<1x1x1xf32>
    %c0_223 = arith.constant 0 : index
    %c0_224 = arith.constant 0 : index
    %c0_225 = arith.constant 0 : index
    %208 = vector.load %arg14[%c0_223, %c0_224, %c0_225] : memref<1x1x1xf32, #tpu.memory_space<vmem>>, vector<1x1x1xf32>
    tpu.vector_store %arg14[%c0_223, %c0_224, %c0_225], %207 {strides = array<i32>} : memref<1x1x1xf32, #tpu.memory_space<vmem>>, vector<1x1x1xf32>,
    return
  }
  func.func @transform_0(%arg0: i32) -> (i32, i32, i32, i32) {
    %c0_i32 = arith.constant 0 : i32
    %c0_i32_0 = arith.constant 0 : i32
    %c0_i32_1 = arith.constant 0 : i32
    %c0_i32_2 = arith.constant 0 : i32
    return %arg0, %c0_i32, %c0_i32_0, %c0_i32_1 : i32, i32, i32, i32
  }
  func.func @transform_1(%arg0: i32) -> (i32, i32) {
    %c0_i32 = arith.constant 0 : i32
    %c0_i32_0 = arith.constant 0 : i32
    %c0_i32_1 = arith.constant 0 : i32
    return %c0_i32, %c0_i32_0 : i32, i32
  }
  func.func @transform_2(%arg0: i32) -> (i32, i32) {
    %c0_i32 = arith.constant 0 : i32
    %c0_i32_0 = arith.constant 0 : i32
    %c0_i32_1 = arith.constant 0 : i32
    return %c0_i32, %c0_i32_0 : i32, i32
  }
  func.func @transform_3(%arg0: i32) -> (i32, i32) {
    %c0_i32 = arith.constant 0 : i32
    %c0_i32_0 = arith.constant 0 : i32
    %c0_i32_1 = arith.constant 0 : i32
    return %c0_i32, %c0_i32_0 : i32, i32
  }
  func.func @transform_4(%arg0: i32) -> (i32, i32) {
    %c0_i32 = arith.constant 0 : i32
    %c0_i32_0 = arith.constant 0 : i32
    %c0_i32_1 = arith.constant 0 : i32
    return %c0_i32, %c0_i32_0 : i32, i32
  }
  func.func @transform_5(%arg0: i32) -> (i32, i32) {
    %c0_i32 = arith.constant 0 : i32
    %c0_i32_0 = arith.constant 0 : i32
    %c0_i32_1 = arith.constant 0 : i32
    return %c0_i32, %c0_i32_0 : i32, i32
  }
  func.func @transform_6(%arg0: i32) -> (i32, i32) {
    %c0_i32 = arith.constant 0 : i32
    %c0_i32_0 = arith.constant 0 : i32
    %c0_i32_1 = arith.constant 0 : i32
    return %c0_i32, %c0_i32_0 : i32, i32
  }
  func.func @transform_7(%arg0: i32) -> (i32, i32) {
    %c0_i32 = arith.constant 0 : i32
    %c0_i32_0 = arith.constant 0 : i32
    %c0_i32_1 = arith.constant 0 : i32
    return %c0_i32, %c0_i32_0 : i32, i32
  }
  func.func @transform_8(%arg0: i32) -> (i32, i32) {
    %c0_i32 = arith.constant 0 : i32
    %c0_i32_0 = arith.constant 0 : i32
    %c0_i32_1 = arith.constant 0 : i32
    return %c0_i32, %c0_i32_0 : i32, i32
  }
  func.func @transform_9(%arg0: i32) -> (i32, i32, i32, i32) {
    %c0_i32 = arith.constant 0 : i32
    %c0_i32_0 = arith.constant 0 : i32
    %c0_i32_1 = arith.constant 0 : i32
    %c0_i32_2 = arith.constant 0 : i32
    return %arg0, %c0_i32, %c0_i32_0, %c0_i32_1 : i32, i32, i32, i32
  }
  func.func @transform_10(%arg0: i32) -> (i32, i32, i32, i32) {
    %c0_i32 = arith.constant 0 : i32
    %c0_i32_0 = arith.constant 0 : i32
    %c0_i32_1 = arith.constant 0 : i32
    %c0_i32_2 = arith.constant 0 : i32
    return %arg0, %c0_i32, %c0_i32_0, %c0_i32_1 : i32, i32, i32, i32
  }
  func.func @transform_11(%arg0: i32) -> (i32, i32, i32, i32) {
    %c0_i32 = arith.constant 0 : i32
    %c0_i32_0 = arith.constant 0 : i32
    %c0_i32_1 = arith.constant 0 : i32
    %c0_i32_2 = arith.constant 0 : i32
    return %arg0, %c0_i32, %c0_i32_0, %c0_i32_1 : i32, i32, i32, i32
  }
  func.func @transform_12(%arg0: i32) -> (i32, i32, i32) {
    %c0_i32 = arith.constant 0 : i32
    %c0_i32_0 = arith.constant 0 : i32
    %c0_i32_1 = arith.constant 0 : i32
    return %arg0, %c0_i32, %c0_i32_0 : i32, i32, i32
  }
  func.func @transform_13(%arg0: i32) -> (i32, i32, i32) {
    %c0_i32 = arith.constant 0 : i32
    %c0_i32_0 = arith.constant 0 : i32
    %c0_i32_1 = arith.constant 0 : i32
    return %arg0, %c0_i32, %c0_i32_0 : i32, i32, i32
  }
}

</mosaic_0001>

<llo_original>
// kernel: tpu_custom_call.1
$region0: #{tpu_custom_call.1}
  #allocation0 [shape = 'u32[]', space=smem, size = 0x4, offset = 0x4, fixed_abs, tag = 'smem constant byte address 0x4 - core index']
  #allocation1 [shape = 'u32[144,128]{1,0:T(1,128)}', space=vmem, size = 0x12000, scoped, tag = 'internal scratch']
  #allocation2 [shape = 'f32[4,8,9]{2,1,0:T(8,128)}', space=vmem, size = 0x4000, scoped, tag = 'scratch operand']
  #allocation3 [shape = 'f32[2,16,10]{2,1,0:T(8,128)}', space=vmem, size = 0x4000, scoped, tag = 'scratch operand']
  #allocation4 [shape = 'f32[1,1]{1,0:T(1,128)S(1)}', space=vmem, size = 0x200, scoped, tag = 'scoped memory for tpu_custom_call.1']
  %s0 = inlined_call_operand.vmem [shape: f32[2,8,4,9], index: 0, kind: input, shape index: {}]
  %s1 = inlined_call_operand.hbm [shape: f32[8,20], index: 1, kind: input, shape index: {}]
  %s2 = inlined_call_operand.vmem [shape: f32[8,1], index: 2, kind: input, shape index: {}]
  %s3 = inlined_call_operand.hbm [shape: f32[16,40], index: 3, kind: input, shape index: {}]
  %s4 = inlined_call_operand.vmem [shape: f32[16,1], index: 4, kind: input, shape index: {}]
  %s5 = inlined_call_operand.vmem [shape: f32[32,80], index: 5, kind: input, shape index: {}]
  %s6 = inlined_call_operand.vmem [shape: f32[32,1], index: 6, kind: input, shape index: {}]
  %s7 = inlined_call_operand.vmem [shape: f32[32,1], index: 7, kind: input, shape index: {}]
  %s8 = inlined_call_operand.<no memory space> [shape: f32[1,1], index: 8, kind: input, shape index: {}]
  %s9 = inlined_call_operand.hbm [shape: f32[2,4,8,8], index: 9, kind: output, shape index: {0}]
  %s10 = inlined_call_operand.vmem [shape: f32[2,2,16,8], index: 10, kind: output, shape index: {1}]
  %s11 = inlined_call_operand.vmem [shape: f32[2,1,32,8], index: 11, kind: output, shape index: {2}]
  %s12 = inlined_call_operand.hbm [shape: f32[2,1,8], index: 12, kind: output, shape index: {3}]
  %s13 = inlined_call_operand.vmem [shape: f32[2,1,1], index: 13, kind: output, shape index: {4}]
  %14 = xla_tuple %s9, %s10, %s11, %s12, %s13
  %s15 = sld [smem:[#allocation0]]
  $region109: #{tpu_custom_call.1} parent=0
    _
  %s17 = ssub.s32 1, %s15
  %s18 = scalar_select 0, %s17, %s15
  %v19 = vstv %s8
  %20 = vst [vmem:[#allocation4] sm:$0x1] %v19
  $region1: #{tpu_custom_call.1} parent=0
    #allocation5 [shape = 'u8[4096]{0}', space=vmem, size = 0x1000, scoped, tag = 'input window, operand 1, single buffered']
    #allocation6 [shape = 's32[2]{0}', space=sflag, size = 0x8, scoped, tag = 'scoped memory for tpu_custom_call.1']
    #allocation7 [shape = 's32[2]{0}', space=sflag, size = 0x8, scoped, tag = 'scoped memory for tpu_custom_call.1']
    #allocation8 [shape = 'u8[8192]{0}', space=vmem, size = 0x2000, scoped, tag = 'input window, operand 3, single buffered']
    #allocation9 [shape = 's32[1]{0}', space=sflag, size = 0x4, scoped, tag = 'scoped memory for tpu_custom_call.1']
    #allocation10 [shape = 'u8[32768]{0}', space=vmem, size = 0x8000, scoped, tag = 'output window, operand 0']
    #allocation11 [shape = 'u8[1024]{0}', space=vmem, size = 0x400, scoped, tag = 'output window, operand 3']
    #allocation12 [shape = 's32[2]{0}', space=sflag, size = 0x8, scoped, tag = 'scoped memory for tpu_custom_call.1']
    %21 = vsyncpa [#allocation6], 0
    %22 = vsyncpa [#allocation9], 0
    %23 = vsyncpa [#allocation7], 0
    %s24 = scalar_lea.sflag [#allocation7], 1
    %25 = vsyncpa %s24, 0
    %26 = vsyncpa [#allocation12], 0
    %s27 = scalar_lea.sflag [#allocation12], 1
    %28 = vsyncpa %s27, 0
    loop: start=0, step=1, limit=4
    $region2: #{tpu_custom_call.1} parent=1 // loop_pre_header
      _
    $region3: #{tpu_custom_call.1} parent=1 // loop_header
      %s30 = sphi 0, %s34
      %p31 = scmp.ge.s32.totalorder %s30, 4
      %s40 = sphi 0, %s42
      %s43 = sphi 0, %s40
      %s44 = sphi 0, %s43
      %s60 = sphi 0, %s44
      %s64 = sphi 0, %s64
      %s66 = sphi 0, %s64
      %s67 = sphi 0, %s66
      %s81 = sphi 0, %s67
      %s85 = sphi 0, %s85
      %s87 = sphi 0, %s85
      %s88 = sphi 0, %s87
      %s102 = sphi 0, %s88
      %s106 = sphi 0, %s106
      %s108 = sphi 0, %s106
      %s109 = sphi 0, %s108
      %s123 = sphi 0, %s109
      %s127 = sphi 0, %s127
      %s129 = sphi 0, %s127
      %s130 = sphi 0, %s129
      %s144 = sphi 0, %s130
      %s148 = sphi 0, %s148
      %s150 = sphi 0, %s148
      %s151 = sphi 0, %s150
      %s165 = sphi 0, %s151
      %s169 = sphi 0, %s169
      %s171 = sphi 0, %s169
      %s172 = sphi 0, %s171
      %s186 = sphi 0, %s172
      %s190 = sphi 0, %s190
      %s192 = sphi 0, %s190
      %s193 = sphi 0, %s192
      %s207 = sphi 0, %s193
      %s211 = sphi 0, %s211
      %s213 = sphi 0, %s211
      %s214 = sphi 0, %s213
      %s228 = sphi 0, %s214
      %s234 = sphi 0, %s236
      %s237 = sphi 0, %s234
      %s238 = sphi 0, %s237
      %s254 = sphi 0, %s238
      %s260 = sphi 0, %s262
      %s263 = sphi 0, %s260
      %s264 = sphi 0, %s263
      %s280 = sphi 0, %s264
      %s286 = sphi 0, %s288
      %s289 = sphi 0, %s286
      %s290 = sphi 0, %s289
      %s306 = sphi 0, %s290
      %s312 = sphi 0, %s314
      %s315 = sphi 0, %s312
      %s316 = sphi 0, %s315
      %s332 = sphi 0, %s316
      %s338 = sphi 0, %s340
      %s341 = sphi 0, %s338
      %s342 = sphi 0, %s341
      %s358 = sphi 0, %s342
    $region4: #{tpu_custom_call.1} parent=1 // loop_header_branch
      %33 = sbr.rel (%p31) target = $region8
    $region5: #{tpu_custom_call.1} parent=1 // loop_body
      %s35 = ssub.s32 %s30, 1
      %s36 = ssub.s32 %s30, 2
      %s37 = sadd.s32 %s30, 1
      %s38 = ssub.s32 %s30, %s37
      %p39 = scmp.eq.s32.totalorder %s38, 0
      %s41 = sadd.s32 %s40, 1
      %s42 = scalar_select %p39, %s40, %s41
      %p45 = pneg %p39
      %p46 = scmp.eq.s32.totalorder %s30, 1
      %p47 = por %p45, %p46
      %p48 = scmp.ne.s32.totalorder %s40, %s43
      %p49 = scmp.eq.s32.totalorder %s30, 0
      %p50 = por %p48, %p49
      %p51 = scmp.ne.s32.totalorder %s40, %s43
      %p52 = scmp.eq.s32.totalorder %s35, 1
      %p53 = por %p51, %p52
      %p54 = scmp.ne.s32.totalorder %s43, %s44
      %p55 = scmp.eq.s32.totalorder %s35, 0
      %p56 = por %p54, %p55
      %p57 = scmp.ne.s32.totalorder %s43, %s44
      %p58 = scmp.eq.s32.totalorder %s36, 1
      %p59 = por %p57, %p58
      %p61 = scmp.ne.s32.totalorder %s44, %s60
      %p62 = scmp.eq.s32.totalorder %s36, 0
      %p63 = por %p61, %p62
      %s65 = sadd.s32 %s64, 1
      %p68 = scmp.eq.s32.totalorder %s30, 1
      %p69 = scmp.ne.s32.totalorder %s64, %s66
      %p70 = scmp.eq.s32.totalorder %s30, 0
      %p71 = por %p69, %p70
      %p72 = scmp.ne.s32.totalorder %s64, %s66
      %p73 = scmp.eq.s32.totalorder %s35, 1
      %p74 = por %p72, %p73
      %p75 = scmp.ne.s32.totalorder %s66, %s67
      %p76 = scmp.eq.s32.totalorder %s35, 0
      %p77 = por %p75, %p76
      %p78 = scmp.ne.s32.totalorder %s66, %s67
      %p79 = scmp.eq.s32.totalorder %s36, 1
      %p80 = por %p78, %p79
      %p82 = scmp.ne.s32.totalorder %s67, %s81
      %p83 = scmp.eq.s32.totalorder %s36, 0
      %p84 = por %p82, %p83
      %s86 = sadd.s32 %s85, 1
      %p89 = scmp.eq.s32.totalorder %s30, 1
      %p90 = scmp.ne.s32.totalorder %s85, %s87
      %p91 = scmp.eq.s32.totalorder %s30, 0
      %p92 = por %p90, %p91
      %p93 = scmp.ne.s32.totalorder %s85, %s87
      %p94 = scmp.eq.s32.totalorder %s35, 1
      %p95 = por %p93, %p94
      %p96 = scmp.ne.s32.totalorder %s87, %s88
      %p97 = scmp.eq.s32.totalorder %s35, 0
      %p98 = por %p96, %p97
      %p99 = scmp.ne.s32.totalorder %s87, %s88
      %p100 = scmp.eq.s32.totalorder %s36, 1
      %p101 = por %p99, %p100
      %p103 = scmp.ne.s32.totalorder %s88, %s102
      %p104 = scmp.eq.s32.totalorder %s36, 0
      %p105 = por %p103, %p104
      %s107 = sadd.s32 %s106, 1
      %p110 = scmp.eq.s32.totalorder %s30, 1
      %p111 = scmp.ne.s32.totalorder %s106, %s108
      %p112 = scmp.eq.s32.totalorder %s30, 0
      %p113 = por %p111, %p112
      %p114 = scmp.ne.s32.totalorder %s106, %s108
      %p115 = scmp.eq.s32.totalorder %s35, 1
      %p116 = por %p114, %p115
      %p117 = scmp.ne.s32.totalorder %s108, %s109
      %p118 = scmp.eq.s32.totalorder %s35, 0
      %p119 = por %p117, %p118
      %p120 = scmp.ne.s32.totalorder %s108, %s109
      %p121 = scmp.eq.s32.totalorder %s36, 1
      %p122 = por %p120, %p121
      %p124 = scmp.ne.s32.totalorder %s109, %s123
      %p125 = scmp.eq.s32.totalorder %s36, 0
      %p126 = por %p124, %p125
      %s128 = sadd.s32 %s127, 1
      %p131 = scmp.eq.s32.totalorder %s30, 1
      %p132 = scmp.ne.s32.totalorder %s127, %s129
      %p133 = scmp.eq.s32.totalorder %s30, 0
      %p134 = por %p132, %p133
      %p135 = scmp.ne.s32.totalorder %s127, %s129
      %p136 = scmp.eq.s32.totalorder %s35, 1
      %p137 = por %p135, %p136
      %p138 = scmp.ne.s32.totalorder %s129, %s130
      %p139 = scmp.eq.s32.totalorder %s35, 0
      %p140 = por %p138, %p139
      %p141 = scmp.ne.s32.totalorder %s129, %s130
      %p142 = scmp.eq.s32.totalorder %s36, 1
      %p143 = por %p141, %p142
      %p145 = scmp.ne.s32.totalorder %s130, %s144
      %p146 = scmp.eq.s32.totalorder %s36, 0
      %p147 = por %p145, %p146
      %s149 = sadd.s32 %s148, 1
      %p152 = scmp.eq.s32.totalorder %s30, 1
      %p153 = scmp.ne.s32.totalorder %s148, %s150
      %p154 = scmp.eq.s32.totalorder %s30, 0
      %p155 = por %p153, %p154
      %p156 = scmp.ne.s32.totalorder %s148, %s150
      %p157 = scmp.eq.s32.totalorder %s35, 1
      %p158 = por %p156, %p157
      %p159 = scmp.ne.s32.totalorder %s150, %s151
      %p160 = scmp.eq.s32.totalorder %s35, 0
      %p161 = por %p159, %p160
      %p162 = scmp.ne.s32.totalorder %s150, %s151
      %p163 = scmp.eq.s32.totalorder %s36, 1
      %p164 = por %p162, %p163
      %p166 = scmp.ne.s32.totalorder %s151, %s165
      %p167 = scmp.eq.s32.totalorder %s36, 0
      %p168 = por %p166, %p167
      %s170 = sadd.s32 %s169, 1
      %p173 = scmp.eq.s32.totalorder %s30, 1
      %p174 = scmp.ne.s32.totalorder %s169, %s171
      %p175 = scmp.eq.s32.totalorder %s30, 0
      %p176 = por %p174, %p175
      %p177 = scmp.ne.s32.totalorder %s169, %s171
      %p178 = scmp.eq.s32.totalorder %s35, 1
      %p179 = por %p177, %p178
      %p180 = scmp.ne.s32.totalorder %s171, %s172
      %p181 = scmp.eq.s32.totalorder %s35, 0
      %p182 = por %p180, %p181
      %p183 = scmp.ne.s32.totalorder %s171, %s172
      %p184 = scmp.eq.s32.totalorder %s36, 1
      %p185 = por %p183, %p184
      %p187 = scmp.ne.s32.totalorder %s172, %s186
      %p188 = scmp.eq.s32.totalorder %s36, 0
      %p189 = por %p187, %p188
      %s191 = sadd.s32 %s190, 1
      %p194 = scmp.eq.s32.totalorder %s30, 1
      %p195 = scmp.ne.s32.totalorder %s190, %s192
      %p196 = scmp.eq.s32.totalorder %s30, 0
      %p197 = por %p195, %p196
      %p198 = scmp.ne.s32.totalorder %s190, %s192
      %p199 = scmp.eq.s32.totalorder %s35, 1
      %p200 = por %p198, %p199
      %p201 = scmp.ne.s32.totalorder %s192, %s193
      %p202 = scmp.eq.s32.totalorder %s35, 0
      %p203 = por %p201, %p202
      %p204 = scmp.ne.s32.totalorder %s192, %s193
      %p205 = scmp.eq.s32.totalorder %s36, 1
      %p206 = por %p204, %p205
      %p208 = scmp.ne.s32.totalorder %s193, %s207
      %p209 = scmp.eq.s32.totalorder %s36, 0
      %p210 = por %p208, %p209
      %s212 = sadd.s32 %s211, 1
      %p215 = scmp.eq.s32.totalorder %s30, 1
      %p216 = scmp.ne.s32.totalorder %s211, %s213
      %p217 = scmp.eq.s32.totalorder %s30, 0
      %p218 = por %p216, %p217
      %p219 = scmp.ne.s32.totalorder %s211, %s213
      %p220 = scmp.eq.s32.totalorder %s35, 1
      %p221 = por %p219, %p220
      %p222 = scmp.ne.s32.totalorder %s213, %s214
      %p223 = scmp.eq.s32.totalorder %s35, 0
      %p224 = por %p222, %p223
      %p225 = scmp.ne.s32.totalorder %s213, %s214
      %p226 = scmp.eq.s32.totalorder %s36, 1
      %p227 = por %p225, %p226
      %p229 = scmp.ne.s32.totalorder %s214, %s228
      %p230 = scmp.eq.s32.totalorder %s36, 0
      %p231 = por %p229, %p230
      %s232 = ssub.s32 %s30, %s37
      %p233 = scmp.eq.s32.totalorder %s232, 0
      %s235 = sadd.s32 %s234, 1
      %s236 = scalar_select %p233, %s234, %s235
      %p239 = pneg %p233
      %p240 = scmp.eq.s32.totalorder %s30, 1
      %p241 = por %p239, %p240
      %p242 = scmp.ne.s32.totalorder %s234, %s237
      %p243 = scmp.eq.s32.totalorder %s30, 0
      %p244 = por %p242, %p243
      %p245 = scmp.ne.s32.totalorder %s234, %s237
      %p246 = scmp.eq.s32.totalorder %s35, 1
      %p247 = por %p245, %p246
      %p248 = scmp.ne.s32.totalorder %s237, %s238
      %p249 = scmp.eq.s32.totalorder %s35, 0
      %p250 = por %p248, %p249
      %p251 = scmp.ne.s32.totalorder %s237, %s238
      %p252 = scmp.eq.s32.totalorder %s36, 1
      %p253 = por %p251, %p252
      %p255 = scmp.ne.s32.totalorder %s238, %s254
      %p256 = scmp.eq.s32.totalorder %s36, 0
      %p257 = por %p255, %p256
      %s258 = ssub.s32 %s30, %s37
      %p259 = scmp.eq.s32.totalorder %s258, 0
      %s261 = sadd.s32 %s260, 1
      %s262 = scalar_select %p259, %s260, %s261
      %p265 = pneg %p259
      %p266 = scmp.eq.s32.totalorder %s30, 1
      %p267 = por %p265, %p266
      %p268 = scmp.ne.s32.totalorder %s260, %s263
      %p269 = scmp.eq.s32.totalorder %s30, 0
      %p270 = por %p268, %p269
      %p271 = scmp.ne.s32.totalorder %s260, %s263
      %p272 = scmp.eq.s32.totalorder %s35, 1
      %p273 = por %p271, %p272
      %p274 = scmp.ne.s32.totalorder %s263, %s264
      %p275 = scmp.eq.s32.totalorder %s35, 0
      %p276 = por %p274, %p275
      %p277 = scmp.ne.s32.totalorder %s263, %s264
      %p278 = scmp.eq.s32.totalorder %s36, 1
      %p279 = por %p277, %p278
      %p281 = scmp.ne.s32.totalorder %s264, %s280
      %p282 = scmp.eq.s32.totalorder %s36, 0
      %p283 = por %p281, %p282
      %s284 = ssub.s32 %s30, %s37
      %p285 = scmp.eq.s32.totalorder %s284, 0
      %s287 = sadd.s32 %s286, 1
      %s288 = scalar_select %p285, %s286, %s287
      %p291 = pneg %p285
      %p292 = scmp.eq.s32.totalorder %s30, 1
      %p293 = por %p291, %p292
      %p294 = scmp.ne.s32.totalorder %s286, %s289
      %p295 = scmp.eq.s32.totalorder %s30, 0
      %p296 = por %p294, %p295
      %p297 = scmp.ne.s32.totalorder %s286, %s289
      %p298 = scmp.eq.s32.totalorder %s35, 1
      %p299 = por %p297, %p298
      %p300 = scmp.ne.s32.totalorder %s289, %s290
      %p301 = scmp.eq.s32.totalorder %s35, 0
      %p302 = por %p300, %p301
      %p303 = scmp.ne.s32.totalorder %s289, %s290
      %p304 = scmp.eq.s32.totalorder %s36, 1
      %p305 = por %p303, %p304
      %p307 = scmp.ne.s32.totalorder %s290, %s306
      %p308 = scmp.eq.s32.totalorder %s36, 0
      %p309 = por %p307, %p308
      %s310 = ssub.s32 %s30, %s37
      %p311 = scmp.eq.s32.totalorder %s310, 0
      %s313 = sadd.s32 %s312, 1
      %s314 = scalar_select %p311, %s312, %s313
      %p317 = pneg %p311
      %p318 = scmp.eq.s32.totalorder %s30, 1
      %p319 = por %p317, %p318
      %p320 = scmp.ne.s32.totalorder %s312, %s315
      %p321 = scmp.eq.s32.totalorder %s30, 0
      %p322 = por %p320, %p321
      %p323 = scmp.ne.s32.totalorder %s312, %s315
      %p324 = scmp.eq.s32.totalorder %s35, 1
      %p325 = por %p323, %p324
      %p326 = scmp.ne.s32.totalorder %s315, %s316
      %p327 = scmp.eq.s32.totalorder %s35, 0
      %p328 = por %p326, %p327
      %p329 = scmp.ne.s32.totalorder %s315, %s316
      %p330 = scmp.eq.s32.totalorder %s36, 1
      %p331 = por %p329, %p330
      %p333 = scmp.ne.s32.totalorder %s316, %s332
      %p334 = scmp.eq.s32.totalorder %s36, 0
      %p335 = por %p333, %p334
      %s336 = ssub.s32 %s30, %s37
      %p337 = scmp.eq.s32.totalorder %s336, 0
      %s339 = sadd.s32 %s338, 1
      %s340 = scalar_select %p337, %s338, %s339
      %p343 = pneg %p337
      %p344 = scmp.eq.s32.totalorder %s30, 1
      %p345 = por %p343, %p344
      %p346 = scmp.ne.s32.totalorder %s338, %s341
      %p347 = scmp.eq.s32.totalorder %s30, 0
      %p348 = por %p346, %p347
      %p349 = scmp.ne.s32.totalorder %s338, %s341
      %p350 = scmp.eq.s32.totalorder %s35, 1
      %p351 = por %p349, %p350
      %p352 = scmp.ne.s32.totalorder %s341, %s342
      %p353 = scmp.eq.s32.totalorder %s35, 0
      %p354 = por %p352, %p353
      %p355 = scmp.ne.s32.totalorder %s341, %s342
      %p356 = scmp.eq.s32.totalorder %s36, 1
      %p357 = por %p355, %p356
      %p359 = scmp.ne.s32.totalorder %s342, %s358
      %p360 = scmp.eq.s32.totalorder %s36, 0
      %p361 = por %p359, %p360
      %p362 = scmp.le.s32.totalorder 1, %s30
      %p363 = scmp.lt.s32.totalorder %s30, 3
      %p364 = pnand %p362, %p363
      %p365 = pneg %p364
      // Predicated region
      $region9: #{tpu_custom_call.1} parent=5 // pred_check
        _
      $region10: #{tpu_custom_call.1} parent=5 // pred_check_branch
        %367 = sbr.rel (%p364) target = $region12
      $region11: #{tpu_custom_call.1} parent=5 // pred_region
        %s368 = ssub.s32 %s30, 1
        // Predicated region
        $region13: #{tpu_custom_call.1} parent=11 // pred_check
          %p369 = pneg %p77
        $region14: #{tpu_custom_call.1} parent=11 // pred_check_branch
          %371 = sbr.rel (%p369) target = $region16
        $region15: #{tpu_custom_call.1} parent=11 // pred_region
          %s373 = ssub.s32 128, 128
          %374 = vsyncadd [#allocation6], %s373
          %s376 = sshll.u32 [#allocation5], 4
          %s377 = int_to_ptr.vmem [resolvable:$true] %s376
          %379 = dma.hbm_to_vmem [thread:$0]  %s1, 128, %s377, [#allocation6]
        $region16: #{tpu_custom_call.1} parent=11 // pred_fallthru
          _
        // Predicated region
        $region17: #{tpu_custom_call.1} parent=11 // pred_check
          %p380 = pneg %p98
        $region18: #{tpu_custom_call.1} parent=11 // pred_check_branch
          %382 = sbr.rel (%p380) target = $region20
        $region19: #{tpu_custom_call.1} parent=11 // pred_region
          _
        $region20: #{tpu_custom_call.1} parent=11 // pred_fallthru
          _
        // Predicated region
        $region21: #{tpu_custom_call.1} parent=11 // pred_check
          %p383 = pneg %p119
        $region22: #{tpu_custom_call.1} parent=11 // pred_check_branch
          %385 = sbr.rel (%p383) target = $region24
        $region23: #{tpu_custom_call.1} parent=11 // pred_region
          %s387 = ssub.s32 256, 256
          %388 = vsyncadd [#allocation9], %s387
          %s389 = sshll.u32 [#allocation8], 4
          %s390 = int_to_ptr.vmem [resolvable:$true] %s389
          %395 = dma.hbm_to_vmem [thread:$0]  %s3, 256, %s390, [#allocation9], 128, 128, 8
        $region24: #{tpu_custom_call.1} parent=11 // pred_fallthru
          _
        // Predicated region
        $region25: #{tpu_custom_call.1} parent=11 // pred_check
          %p396 = pneg %p140
        $region26: #{tpu_custom_call.1} parent=11 // pred_check_branch
          %398 = sbr.rel (%p396) target = $region28
        $region27: #{tpu_custom_call.1} parent=11 // pred_region
          _
        $region28: #{tpu_custom_call.1} parent=11 // pred_fallthru
          _
        // Predicated region
        $region29: #{tpu_custom_call.1} parent=11 // pred_check
          %p399 = pneg %p161
        $region30: #{tpu_custom_call.1} parent=11 // pred_check_branch
          %401 = sbr.rel (%p399) target = $region32
        $region31: #{tpu_custom_call.1} parent=11 // pred_region
          _
        $region32: #{tpu_custom_call.1} parent=11 // pred_fallthru
          _
        // Predicated region
        $region33: #{tpu_custom_call.1} parent=11 // pred_check
          %p402 = pneg %p182
        $region34: #{tpu_custom_call.1} parent=11 // pred_check_branch
          %404 = sbr.rel (%p402) target = $region36
        $region35: #{tpu_custom_call.1} parent=11 // pred_region
          _
        $region36: #{tpu_custom_call.1} parent=11 // pred_fallthru
          _
        // Predicated region
        $region37: #{tpu_custom_call.1} parent=11 // pred_check
          %p405 = pneg %p203
        $region38: #{tpu_custom_call.1} parent=11 // pred_check_branch
          %407 = sbr.rel (%p405) target = $region40
        $region39: #{tpu_custom_call.1} parent=11 // pred_region
          _
        $region40: #{tpu_custom_call.1} parent=11 // pred_fallthru
          _
        // Predicated region
        $region41: #{tpu_custom_call.1} parent=11 // pred_check
          %p408 = pneg %p224
        $region42: #{tpu_custom_call.1} parent=11 // pred_check_branch
          %410 = sbr.rel (%p408) target = $region44
        $region43: #{tpu_custom_call.1} parent=11 // pred_region
          _
        $region44: #{tpu_custom_call.1} parent=11 // pred_fallthru
          _
      $region12: #{tpu_custom_call.1} parent=5 // pred_fallthru
        _
      %p411 = scmp.lt.s32.totalorder %s30, 2
      // Predicated region
      $region45: #{tpu_custom_call.1} parent=5 // pred_check
        %p412 = pneg %p411
      $region46: #{tpu_custom_call.1} parent=5 // pred_check_branch
        %414 = sbr.rel (%p412) target = $region48
      $region47: #{tpu_custom_call.1} parent=5 // pred_region
        // Predicated region
        $region49: #{tpu_custom_call.1} parent=47 // pred_check
          %p415 = pneg %p50
        $region50: #{tpu_custom_call.1} parent=47 // pred_check_branch
          %417 = sbr.rel (%p415) target = $region52
        $region51: #{tpu_custom_call.1} parent=47 // pred_region
          %p418 = scmp.lt.s32.totalorder %s30, 1
          %s419 = scalar_select %p418, %s30, 1
          %s420 = smul.addr %s419, 8
          %s421 = smul.addr %s420, 4
          %s422 = scalar_lea.vmem %s0, %s421
        $region52: #{tpu_custom_call.1} parent=47 // pred_fallthru
          _
      $region48: #{tpu_custom_call.1} parent=5 // pred_fallthru
        _
      %p423 = scmp.le.s32.totalorder 1, %s30
      %p424 = scmp.lt.s32.totalorder %s30, 3
      %p425 = pnand %p423, %p424
      %p426 = pneg %p425
      // Predicated region
      $region53: #{tpu_custom_call.1} parent=5 // pred_check
        _
      $region54: #{tpu_custom_call.1} parent=5 // pred_check_branch
        %428 = sbr.rel (%p425) target = $region56
      $region55: #{tpu_custom_call.1} parent=5 // pred_region
        %s429 = ssub.s32 %s30, 1
        // Predicated region
        $region57: #{tpu_custom_call.1} parent=55 // pred_check
          %p430 = pneg %p77
        $region58: #{tpu_custom_call.1} parent=55 // pred_check_branch
          %432 = sbr.rel (%p430) target = $region60
        $region59: #{tpu_custom_call.1} parent=55 // pred_region
          %433 = dma.done [#allocation6], 128
        $region60: #{tpu_custom_call.1} parent=55 // pred_fallthru
          _
        // Predicated region
        $region61: #{tpu_custom_call.1} parent=55 // pred_check
          %p434 = pneg %p119
        $region62: #{tpu_custom_call.1} parent=55 // pred_check_branch
          %436 = sbr.rel (%p434) target = $region64
        $region63: #{tpu_custom_call.1} parent=55 // pred_region
          %437 = dma.done [#allocation9], 256
        $region64: #{tpu_custom_call.1} parent=55 // pred_fallthru
          _
        %p438 = scmp.lt.s32.totalorder %s35, 1
        %s439 = scalar_select %p438, %s35, 1
        %s440 = smul.addr %s439, 8
        %s441 = smul.addr %s440, 4
        %s442 = scalar_lea.vmem %s0, %s441
        %p443 = pneg %p56
        %p444 = pneg %p53
        %p445 = pneg %p77
        %p446 = pneg %p74
        %p447 = pneg %p98
        %p448 = pneg %p95
        %p449 = pneg %p119
        %p450 = pneg %p116
        %p451 = pneg %p140
        %p452 = pneg %p137
        %p453 = pneg %p161
        %p454 = pneg %p158
        %p455 = pneg %p182
        %p456 = pneg %p179
        %p457 = pneg %p203
        %p458 = pneg %p200
        %p459 = pneg %p224
        %p460 = pneg %p221
        %p461 = pneg %p250
        %p462 = pneg %p247
        %s463 = sand.u32 %s237, 1
        %s464 = scalar_lea.sflag [#allocation7], %s463
        %s465 = sand.u32 %s237, 1
        %s466 = smul.addr %s465, 32
        %s467 = scalar_lea.vmem [#allocation10], %s466
        %p468 = pneg %p276
        %p469 = pneg %p273
        %p470 = scmp.lt.s32.totalorder %s35, 1
        %s471 = scalar_select %p470, %s35, 1
        %s472 = smul.addr %s471, 4
        %s473 = smul.addr %s472, 8
        %s474 = scalar_lea.vmem %s10, %s473
        %p475 = pneg %p302
        %p476 = pneg %p299
        %p477 = scmp.lt.s32.totalorder %s35, 1
        %s478 = scalar_select %p477, %s35, 1
        %s479 = smul.addr %s478, 4
        %s480 = smul.addr %s479, 8
        %s481 = scalar_lea.vmem %s11, %s480
        %p482 = pneg %p328
        %p483 = pneg %p325
        %s484 = sand.u32 %s315, 1
        %s485 = scalar_lea.sflag [#allocation12], %s484
        %s486 = sand.u32 %s315, 1
        %s487 = scalar_lea.vmem [#allocation11], %s486
        %p488 = pneg %p354
        %p489 = pneg %p351
        %p490 = scmp.lt.s32.totalorder %s35, 1
        %s491 = scalar_select %p490, %s35, 1
        %s492 = scalar_lea.vmem %s13, %s491
        %p493 = scmp.lt.s32.totalorder %s35, 1
        %s494 = scalar_select %p493, %s35, 1
        %s495 = smul.addr %s494, 8
        %s496 = smul.addr %s495, 4
        %s497 = scalar_lea.vmem %s0, %s496
        %p498 = scmp.lt.s32.totalorder %s35, 1
        %s499 = scalar_select %p498, %s35, 1
        %s500 = smul.addr %s499, 4
        %s501 = smul.addr %s500, 8
        %s502 = scalar_lea.vmem %s10, %s501
        %p503 = scmp.lt.s32.totalorder %s35, 1
        %s504 = scalar_select %p503, %s35, 1
        %s505 = smul.addr %s504, 4
        %s506 = smul.addr %s505, 8
        %s507 = scalar_lea.vmem %s11, %s506
        %p508 = scmp.lt.s32.totalorder %s35, 1
        %s509 = scalar_select %p508, %s35, 1
        %s510 = scalar_lea.vmem %s13, %s509
        %vm511 = vcmask 7168
        %512 = vst.msk [vmem:[#allocation2] sm:$0xff] %vm511, 0.0
        %s513 = scalar_lea.vmem [#allocation2], 8
        %514 = vst.msk [vmem:[%s513] sm:$0xff] %vm511, 0.0
        %s515 = scalar_lea.vmem [#allocation2], 16
        %vm516 = vcmask 72768
        %517 = vst.msk [vmem:[%s515] sm:$0xff] %vm516, 0.0
        %s518 = scalar_lea.vmem [#allocation2], 24
        %519 = vst.msk [vmem:[%s518] sm:$0xff] %vm516, 0.0
        %520 = vst.msk [vmem:[#allocation3] sm:$0xff] %vm511, 0.0
        %521 = vst.msk [vmem:[#allocation3 + $0x8] sm:$0xff] %vm511, 0.0
        %s522 = scalar_lea.vmem [#allocation3], 16
        %523 = vst.msk [vmem:[%s522] sm:$0xff] %vm511, 0.0
        %524 = vst.msk [vmem:[%s522 + $0x8] sm:$0xff] %vm511, 0.0
        %vm525 = vcmask 80968
        %526 = vst.msk [vmem:[#allocation3] sm:$0xff] %vm525, 0.0
        %527 = vst.msk [vmem:[#allocation3 + $0x8] sm:$0xff] %vm525, 0.0
        %528 = vst.msk [vmem:[%s522] sm:$0xff] %vm525, 0.0
        %529 = vst.msk [vmem:[%s522 + $0x8] sm:$0xff] %vm525, 0.0
        %v530 = vld [vmem:[#allocation5] sm:$0xff]
        %v531 = vld [vmem:[%s2] sm:$0xff]
        %v532 = vld [vmem:[%s497] sm:$0xf]
        %s533 = scalar_lea.vmem %s497, 4
        %v534 = vld [vmem:[%s533] sm:$0xf]
        %s535 = scalar_lea.vmem %s497, 8
        %v536 = vld [vmem:[%s535] sm:$0xf]
        %s537 = scalar_lea.vmem %s497, 12
        %v538 = vld [vmem:[%s537] sm:$0xf]
        %s539 = scalar_lea.vmem %s497, 16
        %v540 = vld [vmem:[%s539] sm:$0xf]
        %v542 = vrot.slane %v534, 4
        %v545 = vrot.slane %v538, 4
        %vm547 = vcmask 1043456
        %v548 = vsel %vm547, %v532, %v542
        %v549 = vsel %vm547, %v536, %v545
        %551 = vset.pattern.permute.xlu0 0
        %552 = vperm.xlu0 %551, %v531
        %v553 = vpop.permute.xlu0 %552
        %vm555 = vcmask 162816
        %v557 = vsel %vm555, %v530, 0
        %v560 = vsel %vm547, %v540, 0
        %562 = vmatprep.subr.mxu0 0.0
        %563 = vmatpush1.msra.mxu0 0.0
        %564 = vmatprep.subr.mxu0 0.0
        %565 = vmatpush1.msra.mxu0 0.0
        %566 = vmatprep.subr.mxu0 0.0
        %567 = vmatpush1.msra.mxu0 0.0
        %568 = vmatprep.subr.mxu0 0.0
        %569 = vmatpush1.msra.mxu0 0.0
        %570 = vmatprep.subr.mxu0 0.0
        %571 = vmatpush1.msra.mxu0 0.0
        %572 = vmatprep.subr.mxu0 0.0
        %573 = vmatpush1.msra.mxu0 0.0
        %574 = vmatprep.subr.mxu0 0.0
        %575 = vmatpush1.msra.mxu0 0.0
        %576 = vmatprep.subr.mxu0 0.0
        %577 = vmatpush1.msra.mxu0 0.0
        %578 = vmatprep.subr.mxu0 0.0
        %579 = vmatpush1.msra.mxu0 0.0
        %580 = vmatprep.subr.mxu0 0.0
        %581 = vmatpush1.msra.mxu0 0.0
        %582 = vmatprep.subr.mxu0 0.0
        %583 = vmatpush1.msra.mxu0 0.0
        %584 = vmatprep.subr.mxu0 0.0
        %585 = vmatpush1.msra.mxu0 0.0
        %586 = vmatprep.subr.mxu0 0.0
        %587 = vmatpush1.msra.mxu0 0.0
        %588 = vmatprep.subr.mxu0 0.0
        %589 = vmatpush1.msra.mxu0 %v560
        %590 = vmatprep.subr.mxu0 0.0
        %591 = vmatpush1.msra.mxu0 %v549
        %592 = vmatprep.subr.mxu0 0.0
        %593 = vmatpush1.msra.mxu0 %v548
        %594 = vmatprep.subr.mxu0 0.0
        %595 = vmatpush2.msra.mxu0 0.0
        %596 = vmatprep.subr.mxu0 0.0
        %597 = vmatpush2.msra.mxu0 0.0
        %598 = vmatprep.subr.mxu0 0.0
        %599 = vmatpush2.msra.mxu0 0.0
        %600 = vmatprep.subr.mxu0 0.0
        %601 = vmatpush2.msra.mxu0 0.0
        %602 = vmatprep.subr.mxu0 0.0
        %603 = vmatpush2.msra.mxu0 0.0
        %604 = vmatprep.subr.mxu0 0.0
        %605 = vmatpush2.msra.mxu0 0.0
        %606 = vmatprep.subr.mxu0 0.0
        %607 = vmatpush2.msra.mxu0 0.0
        %608 = vmatprep.subr.mxu0 0.0
        %609 = vmatpush2.msra.mxu0 0.0
        %610 = vmatprep.subr.mxu0 0.0
        %611 = vmatpush2.msra.mxu0 0.0
        %612 = vmatprep.subr.mxu0 0.0
        %613 = vmatpush2.msra.mxu0 0.0
        %614 = vmatprep.subr.mxu0 0.0
        %615 = vmatpush2.msra.mxu0 0.0
        %616 = vmatprep.subr.mxu0 0.0
        %617 = vmatpush2.msra.mxu0 0.0
        %618 = vmatprep.subr.mxu0 0.0
        %619 = vmatpush2.msra.mxu0 0.0
        %620 = vmatprep.subr.mxu0 0.0
        %621 = vmatpush2.msra.mxu0 0.0
        %622 = vmatprep.subr.mxu0 0.0
        %623 = vmatpush2.msra.mxu0 0.0
        %624 = vmatprep.subr.mxu0 0.0
        %625 = vmatpush2.msra.mxu0 0.0
        %626 = vmatprep.mubr.f32.mxu0 0.0
        %627 = vmatmul.mubr.f32.gmra.mxu0 %v557
        %v628 = vpop.f32.mrf.mxu0
        %v629 = vadd.f32 %v553, %v628
        %v630 = vpop.f32.mrf.mxu0
        %631 = vdwg.mxu0
        %vm632 = vcmask 64512
        %633 = vst.msk [vmem:[%s467] sm:$0xff] %vm632, %v629
        %v634 = vmul.f32 %v629, 0.2
        %v635 = vmax.f32 %v629, %v634
        %636 = vst.msk [vmem:[%s515] sm:$0xff] %vm632, %v635
        %v637 = vld [vmem:[%s535] sm:$0xf]
        %v638 = vld [vmem:[%s537] sm:$0xf]
        %v639 = vld [vmem:[%s539] sm:$0xf]
        %s640 = scalar_lea.vmem %s497, 20
        %v641 = vld [vmem:[%s640] sm:$0xf]
        %s642 = scalar_lea.vmem %s497, 24
        %v643 = vld [vmem:[%s642] sm:$0xf]
        %v645 = vrot.slane %v638, 4
        %v648 = vrot.slane %v641, 4
        %v650 = vsel %vm547, %v637, %v645
        %v651 = vsel %vm547, %v639, %v648
        %v653 = vsel %vm547, %v643, 0
        %655 = vmatprep.subr.mxu0 0.0
        %656 = vmatpush1.msra.mxu0 0.0
        %657 = vmatprep.subr.mxu0 0.0
        %658 = vmatpush1.msra.mxu0 0.0
        %659 = vmatprep.subr.mxu0 0.0
        %660 = vmatpush1.msra.mxu0 0.0
        %661 = vmatprep.subr.mxu0 0.0
        %662 = vmatpush1.msra.mxu0 0.0
        %663 = vmatprep.subr.mxu0 0.0
        %664 = vmatpush1.msra.mxu0 0.0
        %665 = vmatprep.subr.mxu0 0.0
        %666 = vmatpush1.msra.mxu0 0.0
        %667 = vmatprep.subr.mxu0 0.0
        %668 = vmatpush1.msra.mxu0 0.0
        %669 = vmatprep.subr.mxu0 0.0
        %670 = vmatpush1.msra.mxu0 0.0
        %671 = vmatprep.subr.mxu0 0.0
        %672 = vmatpush1.msra.mxu0 0.0
        %673 = vmatprep.subr.mxu0 0.0
        %674 = vmatpush1.msra.mxu0 0.0
        %675 = vmatprep.subr.mxu0 0.0
        %676 = vmatpush1.msra.mxu0 0.0
        %677 = vmatprep.subr.mxu0 0.0
        %678 = vmatpush1.msra.mxu0 0.0
        %679 = vmatprep.subr.mxu0 0.0
        %680 = vmatpush1.msra.mxu0 0.0
        %681 = vmatprep.subr.mxu0 0.0
        %682 = vmatpush1.msra.mxu0 %v653
        %683 = vmatprep.subr.mxu0 0.0
        %684 = vmatpush1.msra.mxu0 %v651
        %685 = vmatprep.subr.mxu0 0.0
        %686 = vmatpush1.msra.mxu0 %v650
        %687 = vmatprep.subr.mxu0 0.0
        %688 = vmatpush2.msra.mxu0 0.0
        %689 = vmatprep.subr.mxu0 0.0
        %690 = vmatpush2.msra.mxu0 0.0
        %691 = vmatprep.subr.mxu0 0.0
        %692 = vmatpush2.msra.mxu0 0.0
        %693 = vmatprep.subr.mxu0 0.0
        %694 = vmatpush2.msra.mxu0 0.0
        %695 = vmatprep.subr.mxu0 0.0
        %696 = vmatpush2.msra.mxu0 0.0
        %697 = vmatprep.subr.mxu0 0.0
        %698 = vmatpush2.msra.mxu0 0.0
        %699 = vmatprep.subr.mxu0 0.0
        %700 = vmatpush2.msra.mxu0 0.0
        %701 = vmatprep.subr.mxu0 0.0
        %702 = vmatpush2.msra.mxu0 0.0
        %703 = vmatprep.subr.mxu0 0.0
        %704 = vmatpush2.msra.mxu0 0.0
        %705 = vmatprep.subr.mxu0 0.0
        %706 = vmatpush2.msra.mxu0 0.0
        %707 = vmatprep.subr.mxu0 0.0
        %708 = vmatpush2.msra.mxu0 0.0
        %709 = vmatprep.subr.mxu0 0.0
        %710 = vmatpush2.msra.mxu0 0.0
        %711 = vmatprep.subr.mxu0 0.0
        %712 = vmatpush2.msra.mxu0 0.0
        %713 = vmatprep.subr.mxu0 0.0
        %714 = vmatpush2.msra.mxu0 0.0
        %715 = vmatprep.subr.mxu0 0.0
        %716 = vmatpush2.msra.mxu0 0.0
        %717 = vmatprep.subr.mxu0 0.0
        %718 = vmatpush2.msra.mxu0 0.0
        %719 = vmatprep.mubr.f32.mxu0 0.0
        %720 = vmatmul.mubr.f32.gmra.mxu0 %v557
        %v721 = vpop.f32.mrf.mxu0
        %v722 = vadd.f32 %v553, %v721
        %v723 = vpop.f32.mrf.mxu0
        %724 = vdwg.mxu0
        %s725 = scalar_lea.vmem %s467, 8 [#allocation10]
        %726 = vst.msk [vmem:[%s725] sm:$0xff] %vm632, %v722
        %v727 = vmul.f32 %v722, 0.2
        %v728 = vmax.f32 %v722, %v727
        %729 = vst.msk [vmem:[%s518] sm:$0xff] %vm632, %v728
        %v730 = vld [vmem:[%s539] sm:$0xf]
        %v731 = vld [vmem:[%s640] sm:$0xf]
        %v732 = vld [vmem:[%s642] sm:$0xf]
        %s733 = scalar_lea.vmem %s497, 28
        %v734 = vld [vmem:[%s733] sm:$0xf]
        %v735 = vld [vmem:[%s497] sm:$0xf]
        %v737 = vrot.slane %v731, 4
        %v740 = vrot.slane %v734, 4
        %743 = vrot.lane.b32.xlu0 %v735, 127
        %v744 = vpop.permute.xlu0 %743
        %v745 = vsel %vm547, %v730, %v737
        %v746 = vsel %vm547, %v732, %v740
        %v747 = vsel %vm547, %v744, 0
        %749 = vmatprep.subr.mxu0 0.0
        %750 = vmatpush1.msra.mxu0 0.0
        %751 = vmatprep.subr.mxu0 0.0
        %752 = vmatpush1.msra.mxu0 0.0
        %753 = vmatprep.subr.mxu0 0.0
        %754 = vmatpush1.msra.mxu0 0.0
        %755 = vmatprep.subr.mxu0 0.0
        %756 = vmatpush1.msra.mxu0 0.0
        %757 = vmatprep.subr.mxu0 0.0
        %758 = vmatpush1.msra.mxu0 0.0
        %759 = vmatprep.subr.mxu0 0.0
        %760 = vmatpush1.msra.mxu0 0.0
        %761 = vmatprep.subr.mxu0 0.0
        %762 = vmatpush1.msra.mxu0 0.0
        %763 = vmatprep.subr.mxu0 0.0
        %764 = vmatpush1.msra.mxu0 0.0
        %765 = vmatprep.subr.mxu0 0.0
        %766 = vmatpush1.msra.mxu0 0.0
        %767 = vmatprep.subr.mxu0 0.0
        %768 = vmatpush1.msra.mxu0 0.0
        %769 = vmatprep.subr.mxu0 0.0
        %770 = vmatpush1.msra.mxu0 0.0
        %771 = vmatprep.subr.mxu0 0.0
        %772 = vmatpush1.msra.mxu0 0.0
        %773 = vmatprep.subr.mxu0 0.0
        %774 = vmatpush1.msra.mxu0 0.0
        %775 = vmatprep.subr.mxu0 0.0
        %776 = vmatpush1.msra.mxu0 %v747
        %777 = vmatprep.subr.mxu0 0.0
        %778 = vmatpush1.msra.mxu0 %v746
        %779 = vmatprep.subr.mxu0 0.0
        %780 = vmatpush1.msra.mxu0 %v745
        %781 = vmatprep.subr.mxu0 0.0
        %782 = vmatpush2.msra.mxu0 0.0
        %783 = vmatprep.subr.mxu0 0.0
        %784 = vmatpush2.msra.mxu0 0.0
        %785 = vmatprep.subr.mxu0 0.0
        %786 = vmatpush2.msra.mxu0 0.0
        %787 = vmatprep.subr.mxu0 0.0
        %788 = vmatpush2.msra.mxu0 0.0
        %789 = vmatprep.subr.mxu0 0.0
        %790 = vmatpush2.msra.mxu0 0.0
        %791 = vmatprep.subr.mxu0 0.0
        %792 = vmatpush2.msra.mxu0 0.0
        %793 = vmatprep.subr.mxu0 0.0
        %794 = vmatpush2.msra.mxu0 0.0
        %795 = vmatprep.subr.mxu0 0.0
        %796 = vmatpush2.msra.mxu0 0.0
        %797 = vmatprep.subr.mxu0 0.0
        %798 = vmatpush2.msra.mxu0 0.0
        %799 = vmatprep.subr.mxu0 0.0
        %800 = vmatpush2.msra.mxu0 0.0
        %801 = vmatprep.subr.mxu0 0.0
        %802 = vmatpush2.msra.mxu0 0.0
        %803 = vmatprep.subr.mxu0 0.0
        %804 = vmatpush2.msra.mxu0 0.0
        %805 = vmatprep.subr.mxu0 0.0
        %806 = vmatpush2.msra.mxu0 0.0
        %807 = vmatprep.subr.mxu0 0.0
        %808 = vmatpush2.msra.mxu0 0.0
        %809 = vmatprep.subr.mxu0 0.0
        %810 = vmatpush2.msra.mxu0 0.0
        %811 = vmatprep.subr.mxu0 0.0
        %812 = vmatpush2.msra.mxu0 0.0
        %813 = vmatprep.mubr.f32.mxu0 0.0
        %814 = vmatmul.mubr.f32.gmra.mxu0 %v557
        %v815 = vpop.f32.mrf.mxu0
        %v816 = vadd.f32 %v553, %v815
        %v817 = vpop.f32.mrf.mxu0
        %818 = vdwg.mxu0
        %s819 = scalar_lea.vmem %s467, 16 [#allocation10]
        %820 = vst.msk [vmem:[%s819] sm:$0xff] %vm632, %v816
        %v821 = vmul.f32 %v816, 0.2
        %v822 = vmax.f32 %v816, %v821
        %824 = vrot.lane.b32.xlu0 %v822, 1
        %v825 = vpop.permute.xlu0 %824
        %vm827 = vcmask 72712
        %828 = vst.msk [vmem:[#allocation2] sm:$0xff] %vm827, %v825
        %v829 = vld [vmem:[%s642] sm:$0xf]
        %v830 = vld [vmem:[%s733] sm:$0xf]
        %v831 = vld [vmem:[%s497] sm:$0xf]
        %v832 = vld [vmem:[%s533] sm:$0xf]
        %v833 = vld [vmem:[%s535] sm:$0xf]
        %v835 = vrot.slane %v830, 4
        %838 = vrot.lane.b32.xlu0 %v831, 127
        %v839 = vpop.permute.xlu0 %838
        %v842 = vrot.slane %v832, 4
        %843 = vrot.lane.b32.xlu0 %v842, 127
        %v844 = vpop.permute.xlu0 %843
        %847 = vrot.lane.b32.xlu0 %v833, 127
        %v848 = vpop.permute.xlu0 %847
        %v849 = vsel %vm547, %v829, %v835
        %v850 = vsel %vm547, %v839, %v844
        %v851 = vsel %vm547, %v848, 0
        %853 = vmatprep.subr.mxu0 0.0
        %854 = vmatpush1.msra.mxu0 0.0
        %855 = vmatprep.subr.mxu0 0.0
        %856 = vmatpush1.msra.mxu0 0.0
        %857 = vmatprep.subr.mxu0 0.0
        %858 = vmatpush1.msra.mxu0 0.0
        %859 = vmatprep.subr.mxu0 0.0
        %860 = vmatpush1.msra.mxu0 0.0
        %861 = vmatprep.subr.mxu0 0.0
        %862 = vmatpush1.msra.mxu0 0.0
        %863 = vmatprep.subr.mxu0 0.0
        %864 = vmatpush1.msra.mxu0 0.0
        %865 = vmatprep.subr.mxu0 0.0
        %866 = vmatpush1.msra.mxu0 0.0
        %867 = vmatprep.subr.mxu0 0.0
        %868 = vmatpush1.msra.mxu0 0.0
        %869 = vmatprep.subr.mxu0 0.0
        %870 = vmatpush1.msra.mxu0 0.0
        %871 = vmatprep.subr.mxu0 0.0
        %872 = vmatpush1.msra.mxu0 0.0
        %873 = vmatprep.subr.mxu0 0.0
        %874 = vmatpush1.msra.mxu0 0.0
        %875 = vmatprep.subr.mxu0 0.0
        %876 = vmatpush1.msra.mxu0 0.0
        %877 = vmatprep.subr.mxu0 0.0
        %878 = vmatpush1.msra.mxu0 0.0
        %879 = vmatprep.subr.mxu0 0.0
        %880 = vmatpush1.msra.mxu0 %v851
        %881 = vmatprep.subr.mxu0 0.0
        %882 = vmatpush1.msra.mxu0 %v850
        %883 = vmatprep.subr.mxu0 0.0
        %884 = vmatpush1.msra.mxu0 %v849
        %885 = vmatprep.subr.mxu0 0.0
        %886 = vmatpush2.msra.mxu0 0.0
        %887 = vmatprep.subr.mxu0 0.0
        %888 = vmatpush2.msra.mxu0 0.0
        %889 = vmatprep.subr.mxu0 0.0
        %890 = vmatpush2.msra.mxu0 0.0
        %891 = vmatprep.subr.mxu0 0.0
        %892 = vmatpush2.msra.mxu0 0.0
        %893 = vmatprep.subr.mxu0 0.0
        %894 = vmatpush2.msra.mxu0 0.0
        %895 = vmatprep.subr.mxu0 0.0
        %896 = vmatpush2.msra.mxu0 0.0
        %897 = vmatprep.subr.mxu0 0.0
        %898 = vmatpush2.msra.mxu0 0.0
        %899 = vmatprep.subr.mxu0 0.0
        %900 = vmatpush2.msra.mxu0 0.0
        %901 = vmatprep.subr.mxu0 0.0
        %902 = vmatpush2.msra.mxu0 0.0
        %903 = vmatprep.subr.mxu0 0.0
        %904 = vmatpush2.msra.mxu0 0.0
        %905 = vmatprep.subr.mxu0 0.0
        %906 = vmatpush2.msra.mxu0 0.0
        %907 = vmatprep.subr.mxu0 0.0
        %908 = vmatpush2.msra.mxu0 0.0
        %909 = vmatprep.subr.mxu0 0.0
        %910 = vmatpush2.msra.mxu0 0.0
        %911 = vmatprep.subr.mxu0 0.0
        %912 = vmatpush2.msra.mxu0 0.0
        %913 = vmatprep.subr.mxu0 0.0
        %914 = vmatpush2.msra.mxu0 0.0
        %915 = vmatprep.subr.mxu0 0.0
        %916 = vmatpush2.msra.mxu0 0.0
        %917 = vmatprep.mubr.f32.mxu0 0.0
        %918 = vmatmul.mubr.f32.gmra.mxu0 %v557
        %v919 = vpop.f32.mrf.mxu0
        %v920 = vadd.f32 %v553, %v919
        %v921 = vpop.f32.mrf.mxu0
        %922 = vdwg.mxu0
        %s923 = scalar_lea.vmem %s467, 24 [#allocation10]
        %924 = vst.msk [vmem:[%s923] sm:$0xff] %vm632, %v920
        %v925 = vmul.f32 %v920, 0.2
        %v926 = vmax.f32 %v920, %v925
        %928 = vrot.lane.b32.xlu0 %v926, 1
        %v929 = vpop.permute.xlu0 %928
        %931 = vst.msk [vmem:[%s513] sm:$0xff] %vm827, %v929
        %v932 = vld [vmem:[#allocation8] sm:$0xff]
        %v933 = vld [vmem:[#allocation8 + $0x8] sm:$0xff]
        %v934 = vld [vmem:[%s4] sm:$0xff]
        %v935 = vld [vmem:[%s4 + $0x8] sm:$0xff]
        %v936 = vld [vmem:[#allocation2] sm:$0xff]
        %v937 = vld [vmem:[%s513] sm:$0xff]
        %v938 = vld [vmem:[%s515] sm:$0xff]
        %v939 = vld [vmem:[%s518] sm:$0xff]
        %941 = vrot.lane.b32.xlu0 %v936, 127
        %v942 = vpop.permute.xlu0 %941
        %945 = vset.pattern.permute.xlu0 0
        %946 = vperm.xlu0 %945, %v934
        %v947 = vpop.permute.xlu0 %946
        %950 = vset.pattern.permute.xlu0 0
        %951 = vperm.xlu0 %950, %v935
        %v952 = vpop.permute.xlu0 %951
        %vm954 = vcmask 326656
        %v956 = vsel %vm954, %v932, 0
        %v959 = vsel %vm954, %v933, 0
        %961 = vmatprep.subr.mxu0 0.0
        %962 = vmatpush1.msra.mxu0 0.0
        %963 = vmatprep.subr.mxu0 0.0
        %964 = vmatpush1.msra.mxu0 0.0
        %965 = vmatprep.subr.mxu0 0.0
        %966 = vmatpush1.msra.mxu0 0.0
        %967 = vmatprep.subr.mxu0 0.0
        %968 = vmatpush1.msra.mxu0 0.0
        %969 = vmatprep.subr.mxu0 0.0
        %970 = vmatpush1.msra.mxu0 0.0
        %971 = vmatprep.subr.mxu0 0.0
        %972 = vmatpush1.msra.mxu0 0.0
        %973 = vmatprep.subr.mxu0 0.0
        %974 = vmatpush1.msra.mxu0 0.0
        %975 = vmatprep.subr.mxu0 0.0
        %976 = vmatpush1.msra.mxu0 0.0
        %977 = vmatprep.subr.mxu0 0.0
        %978 = vmatpush1.msra.mxu0 0.0
        %979 = vmatprep.subr.mxu0 0.0
        %980 = vmatpush1.msra.mxu0 0.0
        %981 = vmatprep.subr.mxu0 0.0
        %982 = vmatpush1.msra.mxu0 0.0
        %983 = vmatprep.subr.mxu0 0.0
        %984 = vmatpush1.msra.mxu0 %v942
        %985 = vmatprep.subr.mxu0 0.0
        %986 = vmatpush1.msra.mxu0 %v939
        %987 = vmatprep.subr.mxu0 0.0
        %988 = vmatpush1.msra.mxu0 %v938
        %989 = vmatprep.subr.mxu0 0.0
        %990 = vmatpush1.msra.mxu0 %v937
        %991 = vmatprep.subr.mxu0 0.0
        %992 = vmatpush1.msra.mxu0 %v936
        %993 = vmatprep.subr.mxu0 0.0
        %994 = vmatpush2.msra.mxu0 0.0
        %995 = vmatprep.subr.mxu0 0.0
        %996 = vmatpush2.msra.mxu0 0.0
        %997 = vmatprep.subr.mxu0 0.0
        %998 = vmatpush2.msra.mxu0 0.0
        %999 = vmatprep.subr.mxu0 0.0
        %1000 = vmatpush2.msra.mxu0 0.0
        %1001 = vmatprep.subr.mxu0 0.0
        %1002 = vmatpush2.msra.mxu0 0.0
        %1003 = vmatprep.subr.mxu0 0.0
        %1004 = vmatpush2.msra.mxu0 0.0
        %1005 = vmatprep.subr.mxu0 0.0
        %1006 = vmatpush2.msra.mxu0 0.0
        %1007 = vmatprep.subr.mxu0 0.0
        %1008 = vmatpush2.msra.mxu0 0.0
        %1009 = vmatprep.subr.mxu0 0.0
        %1010 = vmatpush2.msra.mxu0 0.0
        %1011 = vmatprep.subr.mxu0 0.0
        %1012 = vmatpush2.msra.mxu0 0.0
        %1013 = vmatprep.subr.mxu0 0.0
        %1014 = vmatpush2.msra.mxu0 0.0
        %1015 = vmatprep.subr.mxu0 0.0
        %1016 = vmatpush2.msra.mxu0 0.0
        %1017 = vmatprep.subr.mxu0 0.0
        %1018 = vmatpush2.msra.mxu0 0.0
        %1019 = vmatprep.subr.mxu0 0.0
        %1020 = vmatpush2.msra.mxu0 0.0
        %1021 = vmatprep.subr.mxu0 0.0
        %1022 = vmatpush2.msra.mxu0 0.0
        %1023 = vmatprep.subr.mxu0 0.0
        %1024 = vmatpush2.msra.mxu0 0.0
        %1025 = vmatprep.mubr.f32.mxu0 0.0
        %1026 = vmatmul.mubr.f32.gmra.mxu0 %v956
        %v1027 = vpop.f32.mrf.mxu0
        %v1028 = vadd.f32 %v947, %v1027
        %v1029 = vpop.f32.mrf.mxu0
        %1030 = vmatprep.mubr.f32.mxu0 0.0
        %1031 = vmatmul.mubr.f32.gmra.mxu0 %v959
        %v1032 = vpop.f32.mrf.mxu0
        %v1033 = vadd.f32 %v952, %v1032
        %v1034 = vpop.f32.mrf.mxu0
        %1035 = vdwg.mxu0
        %1036 = vst.msk [vmem:[%s502] sm:$0xff] %vm632, %v1028
        %1037 = vst.msk [vmem:[%s502 + $0x8] sm:$0xff] %vm632, %v1033
        %v1038 = vmul.f32 %v1028, 0.2
        %v1039 = vmul.f32 %v1033, 0.2
        %v1040 = vmax.f32 %v1028, %v1038
        %v1041 = vmax.f32 %v1033, %v1039
        %1044 = vrot.lane.b32.xlu0 %v1040, 1
        %v1045 = vpop.permute.xlu0 %1044
        %1046 = vrot.lane.b32.xlu0 %v1041, 1
        %v1047 = vpop.permute.xlu0 %1046
        %1050 = vst.msk [vmem:[#allocation3] sm:$0xff] %vm827, %v1045
        %1051 = vst.msk [vmem:[#allocation3 + $0x8] sm:$0xff] %vm827, %v1047
        %v1052 = vld [vmem:[%s515] sm:$0xff]
        %v1053 = vld [vmem:[%s518] sm:$0xff]
        %v1054 = vld [vmem:[#allocation2] sm:$0xff]
        %v1055 = vld [vmem:[%s513] sm:$0xff]
        %1057 = vrot.lane.b32.xlu0 %v1054, 127
        %v1058 = vpop.permute.xlu0 %1057
        %1061 = vrot.lane.b32.xlu0 %v1055, 127
        %v1062 = vpop.permute.xlu0 %1061
        %1065 = vrot.lane.b32.xlu0 %v1052, 127
        %v1066 = vpop.permute.xlu0 %1065
        %1068 = vmatprep.subr.mxu0 0.0
        %1069 = vmatpush1.msra.mxu0 0.0
        %1070 = vmatprep.subr.mxu0 0.0
        %1071 = vmatpush1.msra.mxu0 0.0
        %1072 = vmatprep.subr.mxu0 0.0
        %1073 = vmatpush1.msra.mxu0 0.0
        %1074 = vmatprep.subr.mxu0 0.0
        %1075 = vmatpush1.msra.mxu0 0.0
        %1076 = vmatprep.subr.mxu0 0.0
        %1077 = vmatpush1.msra.mxu0 0.0
        %1078 = vmatprep.subr.mxu0 0.0
        %1079 = vmatpush1.msra.mxu0 0.0
        %1080 = vmatprep.subr.mxu0 0.0
        %1081 = vmatpush1.msra.mxu0 0.0
        %1082 = vmatprep.subr.mxu0 0.0
        %1083 = vmatpush1.msra.mxu0 0.0
        %1084 = vmatprep.subr.mxu0 0.0
        %1085 = vmatpush1.msra.mxu0 0.0
        %1086 = vmatprep.subr.mxu0 0.0
        %1087 = vmatpush1.msra.mxu0 0.0
        %1088 = vmatprep.subr.mxu0 0.0
        %1089 = vmatpush1.msra.mxu0 0.0
        %1090 = vmatprep.subr.mxu0 0.0
        %1091 = vmatpush1.msra.mxu0 %v1066
        %1092 = vmatprep.subr.mxu0 0.0
        %1093 = vmatpush1.msra.mxu0 %v1062
        %1094 = vmatprep.subr.mxu0 0.0
        %1095 = vmatpush1.msra.mxu0 %v1058
        %1096 = vmatprep.subr.mxu0 0.0
        %1097 = vmatpush1.msra.mxu0 %v1053
        %1098 = vmatprep.subr.mxu0 0.0
        %1099 = vmatpush1.msra.mxu0 %v1052
        %1100 = vmatprep.subr.mxu0 0.0
        %1101 = vmatpush2.msra.mxu0 0.0
        %1102 = vmatprep.subr.mxu0 0.0
        %1103 = vmatpush2.msra.mxu0 0.0
        %1104 = vmatprep.subr.mxu0 0.0
        %1105 = vmatpush2.msra.mxu0 0.0
        %1106 = vmatprep.subr.mxu0 0.0
        %1107 = vmatpush2.msra.mxu0 0.0
        %1108 = vmatprep.subr.mxu0 0.0
        %1109 = vmatpush2.msra.mxu0 0.0
        %1110 = vmatprep.subr.mxu0 0.0
        %1111 = vmatpush2.msra.mxu0 0.0
        %1112 = vmatprep.subr.mxu0 0.0
        %1113 = vmatpush2.msra.mxu0 0.0
        %1114 = vmatprep.subr.mxu0 0.0
        %1115 = vmatpush2.msra.mxu0 0.0
        %1116 = vmatprep.subr.mxu0 0.0
        %1117 = vmatpush2.msra.mxu0 0.0
        %1118 = vmatprep.subr.mxu0 0.0
        %1119 = vmatpush2.msra.mxu0 0.0
        %1120 = vmatprep.subr.mxu0 0.0
        %1121 = vmatpush2.msra.mxu0 0.0
        %1122 = vmatprep.subr.mxu0 0.0
        %1123 = vmatpush2.msra.mxu0 0.0
        %1124 = vmatprep.subr.mxu0 0.0
        %1125 = vmatpush2.msra.mxu0 0.0
        %1126 = vmatprep.subr.mxu0 0.0
        %1127 = vmatpush2.msra.mxu0 0.0
        %1128 = vmatprep.subr.mxu0 0.0
        %1129 = vmatpush2.msra.mxu0 0.0
        %1130 = vmatprep.subr.mxu0 0.0
        %1131 = vmatpush2.msra.mxu0 0.0
        %1132 = vmatprep.mubr.f32.mxu0 0.0
        %1133 = vmatmul.mubr.f32.gmra.mxu0 %v956
        %v1134 = vpop.f32.mrf.mxu0
        %v1135 = vadd.f32 %v947, %v1134
        %v1136 = vpop.f32.mrf.mxu0
        %1137 = vmatprep.mubr.f32.mxu0 0.0
        %1138 = vmatmul.mubr.f32.gmra.mxu0 %v959
        %v1139 = vpop.f32.mrf.mxu0
        %v1140 = vadd.f32 %v952, %v1139
        %v1141 = vpop.f32.mrf.mxu0
        %1142 = vdwg.mxu0
        %s1143 = scalar_lea.vmem %s502, 16
        %1144 = vst.msk [vmem:[%s1143] sm:$0xff] %vm632, %v1135
        %1145 = vst.msk [vmem:[%s1143 + $0x8] sm:$0xff] %vm632, %v1140
        %v1146 = vmul.f32 %v1135, 0.2
        %v1147 = vmul.f32 %v1140, 0.2
        %v1148 = vmax.f32 %v1135, %v1146
        %v1149 = vmax.f32 %v1140, %v1147
        %1152 = vrot.lane.b32.xlu0 %v1148, 1
        %v1153 = vpop.permute.xlu0 %1152
        %1154 = vrot.lane.b32.xlu0 %v1149, 1
        %v1155 = vpop.permute.xlu0 %1154
        %1158 = vst.msk [vmem:[%s522] sm:$0xff] %vm827, %v1153
        %1159 = vst.msk [vmem:[%s522 + $0x8] sm:$0xff] %vm827, %v1155
        %v1160 = vld [vmem:[%s5] sm:$0xff]
        %v1161 = vld [vmem:[%s5 + $0x8] sm:$0xff]
        %v1162 = vld [vmem:[%s5 + $0x10] sm:$0xff]
        %v1163 = vld [vmem:[%s5 + $0x18] sm:$0xff]
        %v1164 = vld [vmem:[%s6] sm:$0xff]
        %v1165 = vld [vmem:[%s6 + $0x8] sm:$0xff]
        %v1166 = vld [vmem:[%s6 + $0x10] sm:$0xff]
        %v1167 = vld [vmem:[%s6 + $0x18] sm:$0xff]
        %v1168 = vld [vmem:[#allocation3] sm:$0xff]
        %v1169 = vld [vmem:[#allocation3 + $0x8] sm:$0xff]
        %v1170 = vld [vmem:[%s522] sm:$0xff]
        %v1171 = vld [vmem:[%s522 + $0x8] sm:$0xff]
        %1174 = vrot.lane.b32.xlu0 %v1168, 127
        %v1175 = vpop.permute.xlu0 %1174
        %1176 = vrot.lane.b32.xlu0 %v1169, 127
        %v1177 = vpop.permute.xlu0 %1176
        %1182 = vrot.lane.b32.xlu0 %v1170, 127
        %v1183 = vpop.permute.xlu0 %1182
        %1184 = vrot.lane.b32.xlu0 %v1171, 127
        %v1185 = vpop.permute.xlu0 %1184
        %1188 = vrot.lane.b32.xlu0 %v1168, 126
        %v1189 = vpop.permute.xlu0 %1188
        %1190 = vrot.lane.b32.xlu0 %v1169, 126
        %v1191 = vpop.permute.xlu0 %1190
        %1195 = vset.pattern.permute.xlu0 0
        %1196 = vperm.xlu0 %1195, %v1164
        %v1197 = vpop.permute.xlu0 %1196
        %1200 = vset.pattern.permute.xlu0 0
        %1201 = vperm.xlu0 %1200, %v1165
        %v1202 = vpop.permute.xlu0 %1201
        %1205 = vset.pattern.permute.xlu0 0
        %1206 = vperm.xlu0 %1205, %v1166
        %v1207 = vpop.permute.xlu0 %1206
        %1210 = vset.pattern.permute.xlu0 0
        %1211 = vperm.xlu0 %1210, %v1167
        %v1212 = vpop.permute.xlu0 %1211
        %vm1214 = vcmask 654336
        %v1216 = vsel %vm1214, %v1160, 0
        %v1219 = vsel %vm1214, %v1161, 0
        %v1222 = vsel %vm1214, %v1162, 0
        %v1225 = vsel %vm1214, %v1163, 0
        %1227 = vmatprep.subr.mxu0 0.0
        %1228 = vmatpush1.msra.mxu0 0.0
        %1229 = vmatprep.subr.mxu0 0.0
        %1230 = vmatpush1.msra.mxu0 0.0
        %1231 = vmatprep.subr.mxu0 0.0
        %1232 = vmatpush1.msra.mxu0 0.0
        %1233 = vmatprep.subr.mxu0 0.0
        %1234 = vmatpush1.msra.mxu0 0.0
        %1235 = vmatprep.subr.mxu0 0.0
        %1236 = vmatpush1.msra.mxu0 0.0
        %1237 = vmatprep.subr.mxu0 0.0
        %1238 = vmatpush1.msra.mxu0 0.0
        %1239 = vmatprep.subr.mxu0 0.0
        %1240 = vmatpush1.msra.mxu0 %v1191
        %1241 = vmatprep.subr.mxu0 0.0
        %1242 = vmatpush1.msra.mxu0 %v1189
        %1243 = vmatprep.subr.mxu0 0.0
        %1244 = vmatpush1.msra.mxu0 %v1185
        %1245 = vmatprep.subr.mxu0 0.0
        %1246 = vmatpush1.msra.mxu0 %v1183
        %1247 = vmatprep.subr.mxu0 0.0
        %1248 = vmatpush1.msra.mxu0 %v1177
        %1249 = vmatprep.subr.mxu0 0.0
        %1250 = vmatpush1.msra.mxu0 %v1175
        %1251 = vmatprep.subr.mxu0 0.0
        %1252 = vmatpush1.msra.mxu0 %v1171
        %1253 = vmatprep.subr.mxu0 0.0
        %1254 = vmatpush1.msra.mxu0 %v1170
        %1255 = vmatprep.subr.mxu0 0.0
        %1256 = vmatpush1.msra.mxu0 %v1169
        %1257 = vmatprep.subr.mxu0 0.0
        %1258 = vmatpush1.msra.mxu0 %v1168
        %1259 = vmatprep.subr.mxu0 0.0
        %1260 = vmatpush2.msra.mxu0 0.0
        %1261 = vmatprep.subr.mxu0 0.0
        %1262 = vmatpush2.msra.mxu0 0.0
        %1263 = vmatprep.subr.mxu0 0.0
        %1264 = vmatpush2.msra.mxu0 0.0
        %1265 = vmatprep.subr.mxu0 0.0
        %1266 = vmatpush2.msra.mxu0 0.0
        %1267 = vmatprep.subr.mxu0 0.0
        %1268 = vmatpush2.msra.mxu0 0.0
        %1269 = vmatprep.subr.mxu0 0.0
        %1270 = vmatpush2.msra.mxu0 0.0
        %1271 = vmatprep.subr.mxu0 0.0
        %1272 = vmatpush2.msra.mxu0 0.0
        %1273 = vmatprep.subr.mxu0 0.0
        %1274 = vmatpush2.msra.mxu0 0.0
        %1275 = vmatprep.subr.mxu0 0.0
        %1276 = vmatpush2.msra.mxu0 0.0
        %1277 = vmatprep.subr.mxu0 0.0
        %1278 = vmatpush2.msra.mxu0 0.0
        %1279 = vmatprep.subr.mxu0 0.0
        %1280 = vmatpush2.msra.mxu0 0.0
        %1281 = vmatprep.subr.mxu0 0.0
        %1282 = vmatpush2.msra.mxu0 0.0
        %1283 = vmatprep.subr.mxu0 0.0
        %1284 = vmatpush2.msra.mxu0 0.0
        %1285 = vmatprep.subr.mxu0 0.0
        %1286 = vmatpush2.msra.mxu0 0.0
        %1287 = vmatprep.subr.mxu0 0.0
        %1288 = vmatpush2.msra.mxu0 0.0
        %1289 = vmatprep.subr.mxu0 0.0
        %1290 = vmatpush2.msra.mxu0 0.0
        %1291 = vmatprep.mubr.f32.mxu0 0.0
        %1292 = vmatmul.mubr.f32.gmra.mxu0 %v1216
        %v1293 = vpop.f32.mrf.mxu0
        %v1294 = vadd.f32 %v1197, %v1293
        %v1295 = vpop.f32.mrf.mxu0
        %1296 = vmatprep.mubr.f32.mxu0 0.0
        %1297 = vmatmul.mubr.f32.gmra.mxu0 %v1219
        %v1298 = vpop.f32.mrf.mxu0
        %v1299 = vadd.f32 %v1202, %v1298
        %v1300 = vpop.f32.mrf.mxu0
        %1301 = vmatprep.mubr.f32.mxu0 0.0
        %1302 = vmatmul.mubr.f32.gmra.mxu0 %v1222
        %v1303 = vpop.f32.mrf.mxu0
        %v1304 = vadd.f32 %v1207, %v1303
        %v1305 = vpop.f32.mrf.mxu0
        %1306 = vmatprep.mubr.f32.mxu0 0.0
        %1307 = vmatmul.mubr.f32.gmra.mxu0 %v1225
        %v1308 = vpop.f32.mrf.mxu0
        %v1309 = vadd.f32 %v1212, %v1308
        %v1310 = vpop.f32.mrf.mxu0
        %1311 = vdwg.mxu0
        %1312 = vst.msk [vmem:[%s507] sm:$0xff] %vm632, %v1294
        %1313 = vst.msk [vmem:[%s507 + $0x8] sm:$0xff] %vm632, %v1299
        %1314 = vst.msk [vmem:[%s507 + $0x10] sm:$0xff] %vm632, %v1304
        %1315 = vst.msk [vmem:[%s507 + $0x18] sm:$0xff] %vm632, %v1309
        %v1316 = vmul.f32 %v1294, 0.2
        %v1317 = vmul.f32 %v1299, 0.2
        %v1318 = vmul.f32 %v1304, 0.2
        %v1319 = vmul.f32 %v1309, 0.2
        %v1320 = vmax.f32 %v1294, %v1316
        %v1321 = vmax.f32 %v1299, %v1317
        %v1322 = vmax.f32 %v1304, %v1318
        %v1323 = vmax.f32 %v1309, %v1319
        %v1324 = vld [vmem:[%s7] sm:$0xff]
        %v1325 = vld [vmem:[%s7 + $0x8] sm:$0xff]
        %v1326 = vld [vmem:[%s7 + $0x10] sm:$0xff]
        %v1327 = vld [vmem:[%s7 + $0x18] sm:$0xff]
        %1329 = vset.pattern.permute.xlu0 0
        %1330 = vperm.xlu0 %1329, %v1324
        %v1331 = vpop.permute.xlu0 %1330
        %1334 = vset.pattern.permute.xlu0 0
        %1335 = vperm.xlu0 %1334, %v1325
        %v1336 = vpop.permute.xlu0 %1335
        %1339 = vset.pattern.permute.xlu0 0
        %1340 = vperm.xlu0 %1339, %v1326
        %v1341 = vpop.permute.xlu0 %1340
        %1344 = vset.pattern.permute.xlu0 0
        %1345 = vperm.xlu0 %1344, %v1327
        %v1346 = vpop.permute.xlu0 %1345
        %v1348 = vmul.f32 %v1331, %v1320
        %v1349 = vmul.f32 %v1336, %v1321
        %v1350 = vmul.f32 %v1341, %v1322
        %v1351 = vmul.f32 %v1346, %v1323
        %v1352 = vsel %vm632, %v1348, 0.0
        %v1353 = vsel %vm632, %v1349, 0.0
        %v1354 = vadd.f32 %v1352, %v1353
        %v1355 = vsel %vm632, %v1350, 0.0
        %v1356 = vadd.f32 %v1354, %v1355
        %v1357 = vsel %vm632, %v1351, 0.0
        %v1358 = vadd.f32 %v1356, %v1357
        %v1359 = vrot.slane %v1358, 4
        %v1360 = vadd.f32 %v1358, %v1359
        %v1361 = vrot.slane %v1360, 2
        %v1362 = vadd.f32 %v1360, %v1361
        %v1363 = vrot.slane %v1362, 1
        %v1364 = vadd.f32 %v1362, %v1363
        %v1365 = vld [vmem:[#allocation4] sm:$0x1]
        %1367 = vset.pattern.permute.xlu0 0
        %1368 = vperm.xlu0 %1367, %v1365
        %v1369 = vpop.permute.xlu0 %1368
        %v1371 = vlaneseq
        %v1372 = vshrl.u32 %v1371, 7
        %v1373 = vsub.s32 0, %v1372
        %v1374 = vrot.slane %v1369, %v1373
        %v1375 = vadd.f32 %v1364, %v1374
        %vm1376 = vcmask 57344
        %1377 = vst.msk [vmem:[%s487] sm:$0x1] %vm1376, %v1375
        %v1378 = vsel %vm632, %v1375, 0.0
        %1379 = vadd.xlane.f32.xlu0 %v1378
        %v1380 = vpop.xlane.xlu0 %1379
        %v1381 = vadd.f32 %v1380, 0.0
        %v1382 = vmul.f32 %v1381, 0.125
        %vm1383 = vcmask 0
        %1384 = vst.msk [vmem:[%s510] sm:$0x1] %vm1383, %v1382
        %s1385 = sand.u32 %s237, 1
        %s1386 = scalar_lea.sflag [#allocation7], %s1385
        %s1387 = sand.u32 %s237, 1
        %s1388 = smul.addr %s1387, 32
        %s1389 = scalar_lea.vmem [#allocation10], %s1388
        %p1390 = scmp.lt.s32.totalorder %s35, 1
        %s1391 = scalar_select %p1390, %s35, 1
        %s1392 = smul.addr %s1391, 4
        %s1393 = smul.addr %s1392, 8
        %s1394 = scalar_lea.vmem %s10, %s1393
        %p1395 = scmp.lt.s32.totalorder %s35, 1
        %s1396 = scalar_select %p1395, %s35, 1
        %s1397 = smul.addr %s1396, 4
        %s1398 = smul.addr %s1397, 8
        %s1399 = scalar_lea.vmem %s11, %s1398
        %s1400 = sand.u32 %s315, 1
        %s1401 = scalar_lea.sflag [#allocation12], %s1400
        %s1402 = sand.u32 %s315, 1
        %s1403 = scalar_lea.vmem [#allocation11], %s1402
        %p1404 = scmp.lt.s32.totalorder %s35, 1
        %s1405 = scalar_select %p1404, %s35, 1
        %s1406 = scalar_lea.vmem %s13, %s1405
        // Predicated region
        $region65: #{tpu_custom_call.1} parent=55 // pred_check
          %p1407 = pneg %p247
        $region66: #{tpu_custom_call.1} parent=55 // pred_check_branch
          %1409 = sbr.rel (%p1407) target = $region68
        $region67: #{tpu_custom_call.1} parent=55 // pred_region
          %s1411 = ssub.s32 512, 512
          %1412 = vsyncadd %s1386, %s1411
          %s1413 = smul.addr %s35, 4
          %s1414 = smul.addr %s1413, 128
          %s1415 = scalar_lea.hbm %s9, %s1414
          %s1416 = sshll.u32 %s1389, 4
          %s1417 = int_to_ptr.vmem [resolvable:$true] %s1416
          %1422 = dma.vmem_to_hbm [thread:$0]  %s1417, 512, %s1415, %s1386, 128, 128, 8
        $region68: #{tpu_custom_call.1} parent=55 // pred_fallthru
          _
        // Predicated region
        $region69: #{tpu_custom_call.1} parent=55 // pred_check
          %p1423 = pneg %p273
        $region70: #{tpu_custom_call.1} parent=55 // pred_check_branch
          %1425 = sbr.rel (%p1423) target = $region72
        $region71: #{tpu_custom_call.1} parent=55 // pred_region
          _
        $region72: #{tpu_custom_call.1} parent=55 // pred_fallthru
          _
        // Predicated region
        $region73: #{tpu_custom_call.1} parent=55 // pred_check
          %p1426 = pneg %p299
        $region74: #{tpu_custom_call.1} parent=55 // pred_check_branch
          %1428 = sbr.rel (%p1426) target = $region76
        $region75: #{tpu_custom_call.1} parent=55 // pred_region
          _
        $region76: #{tpu_custom_call.1} parent=55 // pred_fallthru
          _
        // Predicated region
        $region77: #{tpu_custom_call.1} parent=55 // pred_check
          %p1429 = pneg %p325
        $region78: #{tpu_custom_call.1} parent=55 // pred_check_branch
          %1431 = sbr.rel (%p1429) target = $region80
        $region79: #{tpu_custom_call.1} parent=55 // pred_region
          %s1433 = ssub.s32 16, 16
          %1434 = vsyncadd %s1401, %s1433
          %s1435 = smul.addr %s35, 16
          %s1436 = scalar_lea.hbm %s12, %s1435
          %s1438 = sshll.u32 %s1403, 4
          %s1439 = int_to_ptr.vmem [resolvable:$true] %s1438
          %1441 = dma.vmem_to_hbm [thread:$0]  %s1439, 16, %s1436, %s1401
        $region80: #{tpu_custom_call.1} parent=55 // pred_fallthru
          _
        // Predicated region
        $region81: #{tpu_custom_call.1} parent=55 // pred_check
          %p1442 = pneg %p351
        $region82: #{tpu_custom_call.1} parent=55 // pred_check_branch
          %1444 = sbr.rel (%p1442) target = $region84
        $region83: #{tpu_custom_call.1} parent=55 // pred_region
          _
        $region84: #{tpu_custom_call.1} parent=55 // pred_fallthru
          _
      $region56: #{tpu_custom_call.1} parent=5 // pred_fallthru
        _
      %p1445 = scmp.le.s32.totalorder 2, %s30
      // Predicated region
      $region85: #{tpu_custom_call.1} parent=5 // pred_check
        %p1446 = pneg %p1445
      $region86: #{tpu_custom_call.1} parent=5 // pred_check_branch
        %1448 = sbr.rel (%p1446) target = $region88
      $region87: #{tpu_custom_call.1} parent=5 // pred_region
        %s1449 = ssub.s32 %s30, 2
        // Predicated region
        $region89: #{tpu_custom_call.1} parent=87 // pred_check
          %p1450 = pneg %p253
        $region90: #{tpu_custom_call.1} parent=87 // pred_check_branch
          %1452 = sbr.rel (%p1450) target = $region92
        $region91: #{tpu_custom_call.1} parent=87 // pred_region
          %s1453 = sand.u32 %s238, 1
          %s1454 = scalar_lea.sflag [#allocation7], %s1453
          %s1455 = sand.u32 %s238, 1
          %s1456 = smul.addr %s1455, 32
          %s1457 = scalar_lea.vmem [#allocation10], %s1456
          %1458 = dma.done %s1454, 512
        $region92: #{tpu_custom_call.1} parent=87 // pred_fallthru
          _
        // Predicated region
        $region93: #{tpu_custom_call.1} parent=87 // pred_check
          %p1459 = pneg %p279
        $region94: #{tpu_custom_call.1} parent=87 // pred_check_branch
          %1461 = sbr.rel (%p1459) target = $region96
        $region95: #{tpu_custom_call.1} parent=87 // pred_region
          %p1462 = scmp.lt.s32.totalorder %s36, 1
          %s1463 = scalar_select %p1462, %s36, 1
          %s1464 = smul.addr %s1463, 4
          %s1465 = smul.addr %s1464, 8
          %s1466 = scalar_lea.vmem %s10, %s1465
        $region96: #{tpu_custom_call.1} parent=87 // pred_fallthru
          _
        // Predicated region
        $region97: #{tpu_custom_call.1} parent=87 // pred_check
          %p1467 = pneg %p305
        $region98: #{tpu_custom_call.1} parent=87 // pred_check_branch
          %1469 = sbr.rel (%p1467) target = $region100
        $region99: #{tpu_custom_call.1} parent=87 // pred_region
          %p1470 = scmp.lt.s32.totalorder %s36, 1
          %s1471 = scalar_select %p1470, %s36, 1
          %s1472 = smul.addr %s1471, 4
          %s1473 = smul.addr %s1472, 8
          %s1474 = scalar_lea.vmem %s11, %s1473
        $region100: #{tpu_custom_call.1} parent=87 // pred_fallthru
          _
        // Predicated region
        $region101: #{tpu_custom_call.1} parent=87 // pred_check
          %p1475 = pneg %p331
        $region102: #{tpu_custom_call.1} parent=87 // pred_check_branch
          %1477 = sbr.rel (%p1475) target = $region104
        $region103: #{tpu_custom_call.1} parent=87 // pred_region
          %s1478 = sand.u32 %s316, 1
          %s1479 = scalar_lea.sflag [#allocation12], %s1478
          %s1480 = sand.u32 %s316, 1
          %s1481 = scalar_lea.vmem [#allocation11], %s1480
          %1482 = dma.done %s1479, 16
        $region104: #{tpu_custom_call.1} parent=87 // pred_fallthru
          _
        // Predicated region
        $region105: #{tpu_custom_call.1} parent=87 // pred_check
          %p1483 = pneg %p357
        $region106: #{tpu_custom_call.1} parent=87 // pred_check_branch
          %1485 = sbr.rel (%p1483) target = $region108
        $region107: #{tpu_custom_call.1} parent=87 // pred_region
          %p1486 = scmp.lt.s32.totalorder %s36, 1
          %s1487 = scalar_select %p1486, %s36, 1
          %s1488 = scalar_lea.vmem %s13, %s1487
        $region108: #{tpu_custom_call.1} parent=87 // pred_fallthru
          _
      $region88: #{tpu_custom_call.1} parent=5 // pred_fallthru
        _
    $region6: #{tpu_custom_call.1} parent=1 // loop_footer
      %s34 = sadd.s32 1, %s30
    $region7: #{tpu_custom_call.1} parent=1 // loop_footer_branch
      %29 = sbr.rel target = $region3
    $region8: #{tpu_custom_call.1} parent=1 // loop_exit
      _
    %1489 = vsyncpa [#allocation6], 1
    %s1490 = scalar_lea.sflag [#allocation6], 1
    %1491 = vsyncpa %s1490, 1
    %1492 = vsyncpa [#allocation9], 1
    %1493 = vsyncpa [#allocation7], 1
    %s1494 = scalar_lea.sflag [#allocation7], 1
    %1495 = vsyncpa %s1494, 1
    %1496 = vsyncpa [#allocation12], 1
    %s1497 = scalar_lea.sflag [#allocation12], 1
    %1498 = vsyncpa %s1497, 1

</llo_original>
